<compile_context>
chip_gen: v5e
topology: v5e:2x2
jax: 0.10.0
libtpu: 0.0.40
codegen_flags: <defaults>
</compile_context>

<pallas_src>
import functools

import jax
import jax.numpy as jnp
from jax.experimental import pallas as pl
from jax.experimental.pallas import tpu as pltpu


def _row_tile(m, cap=512):
    """Largest divisor of m that is <= cap, preferring multiples of 8."""
    if m <= cap:
        return m
    best, best8 = 1, None
    for t in range(1, cap + 1):
        if m % t == 0:
            best = t
            if t % 8 == 0:
                best8 = t
    return best8 if best8 is not None else best


# ----------------------------------------------------------------------------
# Kernel 1: patch embedding = im2patch matmul + bias (bf16 MXU, f32 acc)
#   (equivalent to Conv2d(C, D, kernel=patch, stride=patch)), row-tiled.
# ----------------------------------------------------------------------------
def _matmul_bias_kernel(x_ref, w_ref, b_ref, o_ref):
    o_ref[...] = (
        jnp.dot(x_ref[...].astype(jnp.bfloat16), w_ref[...],
                preferred_element_type=jnp.float32)
        + b_ref[...]
    )


def matmul_bias(x, w, b, row_cap=512):
    M, K = x.shape
    _, Dout = w.shape
    tm = _row_tile(M, row_cap)
    # v7x has 2 TensorCores: make sure the parallel axis has >= 2 steps.
    if M // tm < 2 and M % 2 == 0 and (M // 2) % 8 == 0:
        tm = M // 2
    return pl.pallas_call(
        _matmul_bias_kernel,
        out_shape=jax.ShapeDtypeStruct((M, Dout), jnp.float32),
        grid=(M // tm,),
        in_specs=[
            pl.BlockSpec((tm, K), lambda i: (i, 0)),
            pl.BlockSpec((K, Dout), lambda i: (0, 0)),
            pl.BlockSpec((1, Dout), lambda i: (0, 0)),
        ],
        out_specs=pl.BlockSpec((tm, Dout), lambda i: (i, 0)),
        compiler_params=pltpu.CompilerParams(
            dimension_semantics=("parallel",),
            # Let XLA fuse the im2patch producer into the patches operand.
            allow_input_fusion=[True, False, False],
        ),
    )(x, w, b.reshape(1, Dout))


# ----------------------------------------------------------------------------
# Kernel 2: pre-LN transformer block (single-head attention + MLP) fused with
#   the decoder 1x1 projection D -> 1.  Grid = (batch, query-tile) with the
#   fused QKV projection computed ONCE per batch into VMEM scratch.
# ----------------------------------------------------------------------------
def _transformer_project_kernel(
    x_ref,                                   # (1, N, D) tokens of this batch
    ln1g_ref, ln1b_ref,
    wqkv_ref, wo_ref,
    ln2g_ref, ln2b_ref,
    w1_ref, b1_ref, w2_ref, b2_ref,
    decw_ref, decb_ref,                      # dec_b lives in SMEM
    o_ref,                                   # (1, tq, 1)
    qkv_sc,                                  # VMEM (N, 3D) bf16 scratch
):
    qi = pl.program_id(1)
    tq = o_ref.shape[1]
    D = x_ref.shape[2]

    def layer_norm(x, g, b):
        mu = jnp.mean(x, axis=-1, keepdims=True)
        var = jnp.mean((x - mu) ** 2, axis=-1, keepdims=True)
        return (x - mu) * jax.lax.rsqrt(var + 1e-5) * g + b

    # --- once per batch index: LN1 + fused QKV projection for ALL tokens ---
    @pl.when(qi == 0)
    def _():
        xn_all = layer_norm(x_ref[0], ln1g_ref[...], ln1b_ref[...])   # [N, D]
        qkv = jnp.dot(xn_all.astype(jnp.bfloat16), wqkv_ref[...],
                      preferred_element_type=jnp.float32)             # [N, 3D]
        qkv_sc[...] = qkv.astype(jnp.bfloat16)

    # --- per query tile ---
    row0 = pl.multiple_of(qi * tq, tq)
    x_q = x_ref[0, pl.ds(row0, tq), :]                  # [tq, D] residual (f32)
    q = qkv_sc[pl.ds(row0, tq), 0:D]                    # [tq, D] bf16
    k = qkv_sc[:, D:2 * D]                              # [N, D] bf16
    v = qkv_sc[:, 2 * D:3 * D]                          # [N, D] bf16

    scale = float(D) ** -0.5
    # Contract on the last dims of both operands: no explicit k.T transpose.
    s = jax.lax.dot_general(
        q, k, (((1,), (1,)), ((), ())), preferred_element_type=jnp.float32
    ) * scale                                           # [tq, N] f32
    s = s - jnp.max(s, axis=-1, keepdims=True)
    p = jnp.exp(s)
    # approx reciprocal runs on the otherwise-idle EUP slot.
    p = p * pl.reciprocal(jnp.sum(p, axis=-1, keepdims=True), approx=True)
    attn = jnp.dot(p.astype(jnp.bfloat16), v, preferred_element_type=jnp.float32)
    attn = jnp.dot(attn.astype(jnp.bfloat16), wo_ref[...],
                   preferred_element_type=jnp.float32)
    x1 = x_q + attn

    x2n = layer_norm(x1, ln2g_ref[...], ln2b_ref[...])
    h = jnp.dot(x2n.astype(jnp.bfloat16), w1_ref[...],
                preferred_element_type=jnp.float32) + b1_ref[...]
    # TODO(synk): jax.nn.gelu defaults to tanh approx; PyTorch nn.GELU is erf.
    h = jax.nn.gelu(h)
    mlp = jnp.dot(h.astype(jnp.bfloat16), w2_ref[...],
                  preferred_element_type=jnp.float32) + b2_ref[...]
    x_out = x1 + mlp                                    # [tq, D] f32

    # Fused decoder 1x1 projection D -> 1 on the VPU/XLU (no 1-row MXU dot).
    o_ref[0] = (jnp.sum(x_out * decw_ref[...], axis=-1, keepdims=True)
                + decb_ref[0, 0])


def transformer_block_project(tokens, p, q_cap=512):
    B, N, D = tokens.shape
    Dm = p["mlp_w1"].shape[1]
    tq = _row_tile(N, q_cap)
    n_q = N // tq

    full2d = lambda shp: pl.BlockSpec(shp, lambda b, q: (0, 0))
    return pl.pallas_call(
        _transformer_project_kernel,
        out_shape=jax.ShapeDtypeStruct((B, N, 1), jnp.float32),
        grid=(B, n_q),
        in_specs=[
            pl.BlockSpec((1, N, D), lambda b, q: (b, 0, 0)),  # tokens (resident over q)
            full2d((1, D)), full2d((1, D)),                   # ln1 gamma/beta
            full2d((D, 3 * D)),                               # fused wqkv (bf16)
            full2d((D, D)),                                   # wo (bf16)
            full2d((1, D)), full2d((1, D)),                   # ln2 gamma/beta
            full2d((D, Dm)), full2d((1, Dm)),                 # mlp w1 (bf16), b1
            full2d((Dm, D)), full2d((1, D)),                  # mlp w2 (bf16), b2
            full2d((1, D)),                                   # dec_w (f32)
            pl.BlockSpec(memory_space=pltpu.MemorySpace.SMEM),  # dec_b scalar
        ],
        out_specs=pl.BlockSpec((1, tq, 1), lambda b, q: (b, q, 0)),
        scratch_shapes=[pltpu.VMEM((N, 3 * D), jnp.bfloat16)],
        compiler_params=pltpu.CompilerParams(
            # b parallel (megacore / 2-TC), q arbitrary (carries QKV scratch).
            dimension_semantics=("parallel", "arbitrary"),
            vmem_limit_bytes=32 * 1024 * 1024,
        ),
    )(
        tokens,
        p["ln1_g"], p["ln1_b"],
        p["wqkv"], p["wo"],
        p["ln2_g"], p["ln2_b"],
        p["mlp_w1"], p["mlp_b1"], p["mlp_w2"], p["mlp_b2"],
        p["dec_w"], p["dec_b"],
    )


# ----------------------------------------------------------------------------
# Kernel 3: fused decoder tail = nearest-neighbour upsample (two tiny constant
#   matmuls, no in-kernel reshape) + channel-mean skip + seg_head
#   (Conv2d(1, 1, k=1)).  Reads proj [B,Hp,Wp] and x [B,C,H,W] directly.
# ----------------------------------------------------------------------------
def _decode_seg_kernel(proj_ref, x_ref, uph_ref, upwT_ref,
                       segw_ref, segb_ref, o_ref):
    pm = proj_ref[0]                                   # [th, Wp]
    xb = x_ref[0]                                      # [C, th*patch, W]
    skip = jnp.mean(xb, axis=0)                        # [th*patch, W]
    # nearest-neighbour upsample: up = U_h @ pm @ U_w^T (tiny constant matmuls)
    tmp = jnp.dot(uph_ref[...], pm, preferred_element_type=jnp.float32)
    up = jnp.dot(tmp, upwT_ref[...], preferred_element_type=jnp.float32)
    o_ref[0] = (up + skip) * segw_ref[0, 0] + segb_ref[0, 0]


def decode_seg(proj, x, seg_w, seg_b, patch, hp_cap=64):
    B, Hp, Wp = proj.shape
    _, C, H, W = x.shape
    th = _row_tile(Hp, hp_cap)              # patch-rows per grid step
    n_r = Hp // th
    rows = th * patch

    # Constant upsample matrices (identical for every row tile).
    uph = (jnp.arange(rows)[:, None] // patch
           == jnp.arange(th)[None, :]).astype(jnp.float32)       # [rows, th]
    upwT = (jnp.arange(Wp)[:, None]
            == jnp.arange(W)[None, :] // patch).astype(jnp.float32)  # [Wp, W]

    # TODO(synk): emit a lane-dense (multiple-of-128) output slab when W is
    # not a multiple of 128 (needs an in-kernel [rows, W] -> [1, rows*W]
    # relayout); output traffic here is 1/C of the fused read traffic.
    return pl.pallas_call(
        _decode_seg_kernel,
        out_shape=jax.ShapeDtypeStruct((B, H, W), jnp.float32),
        grid=(B, n_r),
        in_specs=[
            pl.BlockSpec((1, th, Wp), lambda b, r: (b, r, 0)),
            pl.BlockSpec((1, C, rows, W), lambda b, r: (b, 0, r, 0)),
            pl.BlockSpec((rows, th), lambda b, r: (0, 0)),
            pl.BlockSpec((Wp, W), lambda b, r: (0, 0)),
            pl.BlockSpec(memory_space=pltpu.MemorySpace.SMEM),   # seg_w
            pl.BlockSpec(memory_space=pltpu.MemorySpace.SMEM),   # seg_b
        ],
        out_specs=pl.BlockSpec((1, rows, W), lambda b, r: (b, r, 0)),
        compiler_params=pltpu.CompilerParams(
            dimension_semantics=("parallel", "parallel")),
    )(proj, x, uph, upwT, seg_w, seg_b)


# ----------------------------------------------------------------------------
# Parameter init (deterministic, synthetic); MXU weights stored in bf16.
# ----------------------------------------------------------------------------
def init_params(key, c_in, patch, d_model, d_mlp, num_classes):
    del num_classes  # seg_head specialized to 1 class (scalar scale + bias)
    ks = jax.random.split(key, 8)
    s = 0.02
    P = c_in * patch * patch

    def bf16_w(k, shape):
        return (s * jax.random.normal(k, shape, jnp.float32)).astype(jnp.bfloat16)

    return {
        # patch embed (Conv2d(c_in, d_model, patch, stride=patch) flattened)
        "embed_w": bf16_w(ks[0], (P, d_model)),
        "embed_b": jnp.zeros((d_model,), jnp.float32),
        # transformer block (fused QKV)
        "ln1_g": jnp.ones((1, d_model), jnp.float32),
        "ln1_b": jnp.zeros((1, d_model), jnp.float32),
        "wqkv": bf16_w(ks[1], (d_model, 3 * d_model)),
        "wo": bf16_w(ks[2], (d_model, d_model)),
        "ln2_g": jnp.ones((1, d_model), jnp.float32),
        "ln2_b": jnp.zeros((1, d_model), jnp.float32),
        "mlp_w1": bf16_w(ks[3], (d_model, d_mlp)),
        "mlp_b1": jnp.zeros((1, d_mlp), jnp.float32),
        "mlp_w2": bf16_w(ks[4], (d_mlp, d_model)),
        "mlp_b2": jnp.zeros((1, d_model), jnp.float32),
        # decoder 1x1 projection D -> 1 (VPU path: keep f32)
        "dec_w": s * jax.random.normal(ks[5], (1, d_model), jnp.float32),
        "dec_b": jnp.zeros((1, 1), jnp.float32),
        # seg_head = Conv2d(1, 1, kernel=1): scalar scale + bias
        "seg_w": s * jax.random.normal(ks[6], (1, 1), jnp.float32) + 1.0,
        "seg_b": jnp.zeros((1, 1), jnp.float32),
    }


# ----------------------------------------------------------------------------
# Forward pass (glue in plain JAX, hot paths in Pallas)
# ----------------------------------------------------------------------------
def trans_unet_forward(x, params, patch):
    B, C, H, W = x.shape
    Hp, Wp = H // patch, W // patch
    N = Hp * Wp
    D = params["embed_w"].shape[1]

    # --- encoder: patch embed (im2patch + row-tiled Pallas matmul) ---
    # TODO(synk): fold this gather into the embed kernel's index_map / accept
    # NHWC so the full-image transpose disappears (allow_input_fusion already
    # lets XLA write the transpose straight into the kernel operand).
    patches = (
        x.reshape(B, C, Hp, patch, Wp, patch)
        .transpose(0, 2, 4, 1, 3, 5)                 # [B, Hp, Wp, C, p, p]
        .reshape(B * N, C * patch * patch)
    )
    tokens = matmul_bias(patches, params["embed_w"], params["embed_b"])
    tokens = tokens.reshape(B, N, D)

    # --- encoder transformer block + fused decoder projection (Pallas) ---
    proj = transformer_block_project(tokens, params)   # [B, N, 1]
    proj = proj.reshape(B, Hp, Wp)                      # free reshape

    # --- fused decoder tail: upsample + channel-mean skip + seg_head ---
    out = decode_seg(proj, x, params["seg_w"], params["seg_b"], patch)
    return out.reshape(B, 1, H, W)                      # NCHW


if __name__ == "__main__":
    B, C, H, W = 2, 4, 16, 16
    patch = 4
    num_classes = 1
    d_model, d_mlp = 128, 256   # lane-aligned small sizes

    x = jax.random.normal(jax.random.PRNGKey(0), (B, C, H, W), dtype=jnp.float32)
    params = init_params(jax.random.PRNGKey(1), C, patch, d_model, d_mlp,
                         num_classes)

    fwd = jax.jit(functools.partial(trans_unet_forward, patch=patch))
    out = jax.block_until_ready(fwd(x, params))

    assert out.shape == (B, num_classes, H, W), out.shape
    assert bool(jnp.all(jnp.isfinite(out)))
    print("KERNEL_OK")
</pallas_src>

<mosaic_0001>
module attributes {stable_mosaic.version = 11 : i64} {
  func.func @_matmul_bias_kernel(%arg0: i32, %arg1: memref<16x64xf32, #tpu.memory_space<vmem>>, %arg2: memref<64x128xbf16, #tpu.memory_space<vmem>>, %arg3: memref<1x128xf32, #tpu.memory_space<vmem>>, %arg4: memref<16x128xf32, #tpu.memory_space<vmem>>) attributes {dimension_semantics = [#tpu.dimension_semantics<parallel>], iteration_bounds = array<i64: 2>, scalar_prefetch = 0 : i64, scratch_operands = 0 : i64, tpu.core_type = #tpu.core_type<tc>, window_params = [{transform_indices = @transform_0, window_bounds = array<i64: 16, 64>}, {pipeline_mode = #tpu.pipeline_mode<synchronous>, transform_indices = @transform_1, window_bounds = array<i64: 64, 128>}, {pipeline_mode = #tpu.pipeline_mode<synchronous>, transform_indices = @transform_2, window_bounds = array<i64: 1, 128>}, {transform_indices = @transform_3, window_bounds = array<i64: 16, 128>}]} {
    %c0 = arith.constant 0 : index
    %c0_0 = arith.constant 0 : index
    %0 = vector.load %arg1[%c0, %c0_0] : memref<16x64xf32, #tpu.memory_space<vmem>>, vector<16x64xf32>
    %1 = arith.truncf %0 : vector<16x64xf32> to vector<16x64xbf16>
    %c0_1 = arith.constant 0 : index
    %c0_2 = arith.constant 0 : index
    %2 = vector.load %arg2[%c0_1, %c0_2] : memref<64x128xbf16, #tpu.memory_space<vmem>>, vector<64x128xbf16>
    %cst = arith.constant dense<0.000000e+00> : vector<16x128xf32>
    %3 = tpu.matmul %1, %2, %cst {dimension_numbers = #tpu.dot_dimension_numbers<[1], [0], [0], [1], [0, 0, 1, 1], [], []>} : vector<16x64xbf16>, vector<64x128xbf16>, vector<16x128xf32> -> vector<16x128xf32>
    %c0_3 = arith.constant 0 : index
    %c0_4 = arith.constant 0 : index
    %4 = vector.load %arg3[%c0_3, %c0_4] : memref<1x128xf32, #tpu.memory_space<vmem>>, vector<1x128xf32>
    %5 = vector.broadcast %4 : vector<1x128xf32> to vector<16x128xf32>
    %6 = arith.addf %3, %5 : vector<16x128xf32>
    %c0_5 = arith.constant 0 : index
    %c0_6 = arith.constant 0 : index
    %7 = vector.load %arg4[%c0_5, %c0_6] : memref<16x128xf32, #tpu.memory_space<vmem>>, vector<16x128xf32>
    tpu.vector_store %arg4[%c0_5, %c0_6], %6 {strides = array<i32>} : memref<16x128xf32, #tpu.memory_space<vmem>>, vector<16x128xf32>,
    return
  }
  func.func @transform_0(%arg0: i32) -> (i32, i32) {
    %c0_i32 = arith.constant 0 : i32
    %c0_i32_0 = arith.constant 0 : i32
    return %arg0, %c0_i32 : i32, i32
  }
  func.func @transform_1(%arg0: i32) -> (i32, i32) {
    %c0_i32 = arith.constant 0 : i32
    %c0_i32_0 = arith.constant 0 : i32
    %c0_i32_1 = arith.constant 0 : i32
    return %c0_i32, %c0_i32_0 : i32, i32
  }
  func.func @transform_2(%arg0: i32) -> (i32, i32) {
    %c0_i32 = arith.constant 0 : i32
    %c0_i32_0 = arith.constant 0 : i32
    %c0_i32_1 = arith.constant 0 : i32
    return %c0_i32, %c0_i32_0 : i32, i32
  }
  func.func @transform_3(%arg0: i32) -> (i32, i32) {
    %c0_i32 = arith.constant 0 : i32
    %c0_i32_0 = arith.constant 0 : i32
    return %arg0, %c0_i32 : i32, i32
  }
}

module attributes {stable_mosaic.version = 11 : i64} {
  func.func @_transformer_project_kernel(%arg0: i32, %arg1: i32, %arg2: memref<1x16x128xf32, #tpu.memory_space<vmem>>, %arg3: memref<1x128xf32, #tpu.memory_space<vmem>>, %arg4: memref<1x128xf32, #tpu.memory_space<vmem>>, %arg5: memref<128x384xbf16, #tpu.memory_space<vmem>>, %arg6: memref<128x128xbf16, #tpu.memory_space<vmem>>, %arg7: memref<1x128xf32, #tpu.memory_space<vmem>>, %arg8: memref<1x128xf32, #tpu.memory_space<vmem>>, %arg9: memref<128x256xbf16, #tpu.memory_space<vmem>>, %arg10: memref<1x256xf32, #tpu.memory_space<vmem>>, %arg11: memref<256x128xbf16, #tpu.memory_space<vmem>>, %arg12: memref<1x128xf32, #tpu.memory_space<vmem>>, %arg13: memref<1x128xf32, #tpu.memory_space<vmem>>, %arg14: memref<1x1xf32, #tpu.memory_space<smem>>, %arg15: memref<1x16x1xf32, #tpu.memory_space<vmem>>, %arg16: memref<16x384xbf16, #tpu.memory_space<vmem>>) attributes {dimension_semantics = [#tpu.dimension_semantics<parallel>, #tpu.dimension_semantics<arbitrary>], iteration_bounds = array<i64: 2, 1>, scalar_prefetch = 0 : i64, scratch_operands = 1 : i64, tpu.core_type = #tpu.core_type<tc>, window_params = [{transform_indices = @transform_0, window_bounds = array<i64: 1, 16, 128>}, {pipeline_mode = #tpu.pipeline_mode<synchronous>, transform_indices = @transform_1, window_bounds = array<i64: 1, 128>}, {pipeline_mode = #tpu.pipeline_mode<synchronous>, transform_indices = @transform_2, window_bounds = array<i64: 1, 128>}, {pipeline_mode = #tpu.pipeline_mode<synchronous>, transform_indices = @transform_3, window_bounds = array<i64: 128, 384>}, {pipeline_mode = #tpu.pipeline_mode<synchronous>, transform_indices = @transform_4, window_bounds = array<i64: 128, 128>}, {pipeline_mode = #tpu.pipeline_mode<synchronous>, transform_indices = @transform_5, window_bounds = array<i64: 1, 128>}, {pipeline_mode = #tpu.pipeline_mode<synchronous>, transform_indices = @transform_6, window_bounds = array<i64: 1, 128>}, {pipeline_mode = #tpu.pipeline_mode<synchronous>, transform_indices = @transform_7, window_bounds = array<i64: 128, 256>}, {pipeline_mode = #tpu.pipeline_mode<synchronous>, transform_indices = @transform_8, window_bounds = array<i64: 1, 256>}, {pipeline_mode = #tpu.pipeline_mode<synchronous>, transform_indices = @transform_9, window_bounds = array<i64: 256, 128>}, {pipeline_mode = #tpu.pipeline_mode<synchronous>, transform_indices = @transform_10, window_bounds = array<i64: 1, 128>}, {pipeline_mode = #tpu.pipeline_mode<synchronous>, transform_indices = @transform_11, window_bounds = array<i64: 1, 128>}, {transform_indices = @transform_12, window_bounds = array<i64: 1, 1>}, {transform_indices = @transform_13, window_bounds = array<i64: 1, 16, 1>}]} {
    %c0_i32 = arith.constant 0 : i32
    %0 = arith.cmpi eq, %arg1, %c0_i32 : i32
    %1 = arith.extui %0 : i1 to i32
    %c0_i32_0 = arith.constant 0 : i32
    %2 = arith.cmpi ne, %1, %c0_i32_0 : i32
    scf.if %2 {
      %c0_43 = arith.constant 0 : index
      %c0_44 = arith.constant 0 : index
      %c0_45 = arith.constant 0 : index
      %92 = vector.load %arg2[%c0_43, %c0_44, %c0_45] : memref<1x16x128xf32, #tpu.memory_space<vmem>>, vector<1x16x128xf32>
      %93 = vector.shape_cast %92 : vector<1x16x128xf32> to vector<16x128xf32>
      %c0_46 = arith.constant 0 : index
      %c0_47 = arith.constant 0 : index
      %94 = vector.load %arg3[%c0_46, %c0_47] : memref<1x128xf32, #tpu.memory_space<vmem>>, vector<1x128xf32>
      %c0_48 = arith.constant 0 : index
      %c0_49 = arith.constant 0 : index
      %95 = vector.load %arg4[%c0_48, %c0_49] : memref<1x128xf32, #tpu.memory_space<vmem>>, vector<1x128xf32>
      %cst_50 = arith.constant dense<0.000000e+00> : vector<16xf32>
      %96 = vector.multi_reduction <add>, %93, %cst_50 [1] : vector<16x128xf32> to vector<16xf32>
      %97 = vector.shape_cast %96 : vector<16xf32> to vector<16x1xf32>
      %cst_51 = arith.constant 1.280000e+02 : f32
      %98 = vector.broadcast %cst_51 : f32 to vector<16x1xf32>
      %99 = arith.divf %97, %98 : vector<16x1xf32>
      %100 = vector.broadcast %99 : vector<16x1xf32> to vector<16x128xf32>
      %101 = arith.subf %93, %100 : vector<16x128xf32>
      %102 = arith.mulf %101, %101 : vector<16x128xf32>
      %cst_52 = arith.constant dense<0.000000e+00> : vector<16xf32>
      %103 = vector.multi_reduction <add>, %102, %cst_52 [1] : vector<16x128xf32> to vector<16xf32>
      %104 = vector.shape_cast %103 : vector<16xf32> to vector<16x1xf32>
      %cst_53 = arith.constant 1.280000e+02 : f32
      %105 = vector.broadcast %cst_53 : f32 to vector<16x1xf32>
      %106 = arith.divf %104, %105 : vector<16x1xf32>
      %107 = vector.broadcast %99 : vector<16x1xf32> to vector<16x128xf32>
      %108 = arith.subf %93, %107 : vector<16x128xf32>
      %cst_54 = arith.constant 9.99999974E-6 : f32
      %109 = vector.broadcast %cst_54 : f32 to vector<16x1xf32>
      %110 = arith.addf %106, %109 : vector<16x1xf32>
      %111 = math.rsqrt %110 : vector<16x1xf32>
      %112 = vector.broadcast %111 : vector<16x1xf32> to vector<16x128xf32>
      %113 = arith.mulf %108, %112 : vector<16x128xf32>
      %114 = vector.broadcast %94 : vector<1x128xf32> to vector<16x128xf32>
      %115 = arith.mulf %113, %114 : vector<16x128xf32>
      %116 = vector.broadcast %95 : vector<1x128xf32> to vector<16x128xf32>
      %117 = arith.addf %115, %116 : vector<16x128xf32>
      %118 = arith.truncf %117 : vector<16x128xf32> to vector<16x128xbf16>
      %c0_55 = arith.constant 0 : index
      %c0_56 = arith.constant 0 : index
      %119 = vector.load %arg5[%c0_55, %c0_56] : memref<128x384xbf16, #tpu.memory_space<vmem>>, vector<128x384xbf16>
      %cst_57 = arith.constant dense<0.000000e+00> : vector<16x384xf32>
      %120 = tpu.matmul %118, %119, %cst_57 {dimension_numbers = #tpu.dot_dimension_numbers<[1], [0], [0], [1], [0, 0, 1, 1], [], []>} : vector<16x128xbf16>, vector<128x384xbf16>, vector<16x384xf32> -> vector<16x384xf32>
      %121 = arith.truncf %120 : vector<16x384xf32> to vector<16x384xbf16>
      %c0_58 = arith.constant 0 : index
      %c0_59 = arith.constant 0 : index
      %122 = vector.load %arg16[%c0_58, %c0_59] : memref<16x384xbf16, #tpu.memory_space<vmem>>, vector<16x384xbf16>
      tpu.vector_store %arg16[%c0_58, %c0_59], %121 {strides = array<i32>} : memref<16x384xbf16, #tpu.memory_space<vmem>>, vector<16x384xbf16>,
    } else {
    }
    %c16_i32 = arith.constant 16 : i32
    %3 = arith.muli %arg1, %c16_i32 : i32
    %4 = tpu.assume_multiple %3, 16 : i32
    %c0 = arith.constant 0 : index
    %5 = arith.index_cast %4 : i32 to index
    %c0_1 = arith.constant 0 : index
    %6 = vector.load %arg2[%c0, %5, %c0_1] : memref<1x16x128xf32, #tpu.memory_space<vmem>>, vector<1x16x128xf32>
    %7 = vector.shape_cast %6 : vector<1x16x128xf32> to vector<16x128xf32>
    %8 = arith.index_cast %4 : i32 to index
    %c0_2 = arith.constant 0 : index
    %9 = vector.load %arg16[%8, %c0_2] : memref<16x384xbf16, #tpu.memory_space<vmem>>, vector<16x128xbf16>
    %c0_3 = arith.constant 0 : index
    %c128 = arith.constant 128 : index
    %10 = vector.load %arg16[%c0_3, %c128] : memref<16x384xbf16, #tpu.memory_space<vmem>>, vector<16x128xbf16>
    %c0_4 = arith.constant 0 : index
    %c256 = arith.constant 256 : index
    %11 = vector.load %arg16[%c0_4, %c256] : memref<16x384xbf16, #tpu.memory_space<vmem>>, vector<16x128xbf16>
    %cst = arith.constant dense<0.000000e+00> : vector<16x16xf32>
    %12 = tpu.matmul %9, %10, %cst {dimension_numbers = #tpu.dot_dimension_numbers<[1], [1], [0], [0], [0, 0, 1, 0], [], []>} : vector<16x128xbf16>, vector<16x128xbf16>, vector<16x16xf32> -> vector<16x16xf32>
    %cst_5 = arith.constant 0.0883883461 : f32
    %13 = vector.broadcast %cst_5 : f32 to vector<16x16xf32>
    %14 = arith.mulf %12, %13 : vector<16x16xf32>
    %cst_6 = arith.constant dense<0xFF800000> : vector<16xf32>
    %15 = vector.multi_reduction <maximumf>, %14, %cst_6 [1] : vector<16x16xf32> to vector<16xf32>
    %16 = vector.shape_cast %15 : vector<16xf32> to vector<16x1xf32>
    %17 = vector.broadcast %16 : vector<16x1xf32> to vector<16x16xf32>
    %18 = arith.subf %14, %17 : vector<16x16xf32>
    %19 = math.exp %18 : vector<16x16xf32>
    %cst_7 = arith.constant dense<0.000000e+00> : vector<16xf32>
    %20 = vector.multi_reduction <add>, %19, %cst_7 [1] : vector<16x16xf32> to vector<16xf32>
    %21 = vector.shape_cast %20 : vector<16xf32> to vector<16x1xf32>
    %22 = tpu.reciprocal %21 {approx = true} : vector<16x1xf32> -> vector<16x1xf32>
    %23 = vector.broadcast %22 : vector<16x1xf32> to vector<16x16xf32>
    %24 = arith.mulf %19, %23 : vector<16x16xf32>
    %25 = arith.truncf %24 : vector<16x16xf32> to vector<16x16xbf16>
    %cst_8 = arith.constant dense<0.000000e+00> : vector<16x128xf32>
    %26 = tpu.matmul %25, %11, %cst_8 {dimension_numbers = #tpu.dot_dimension_numbers<[1], [0], [0], [1], [0, 0, 1, 1], [], []>} : vector<16x16xbf16>, vector<16x128xbf16>, vector<16x128xf32> -> vector<16x128xf32>
    %27 = arith.truncf %26 : vector<16x128xf32> to vector<16x128xbf16>
    %c0_9 = arith.constant 0 : index
    %c0_10 = arith.constant 0 : index
    %28 = vector.load %arg6[%c0_9, %c0_10] : memref<128x128xbf16, #tpu.memory_space<vmem>>, vector<128x128xbf16>
    %cst_11 = arith.constant dense<0.000000e+00> : vector<16x128xf32>
    %29 = tpu.matmul %27, %28, %cst_11 {dimension_numbers = #tpu.dot_dimension_numbers<[1], [0], [0], [1], [0, 0, 1, 1], [], []>} : vector<16x128xbf16>, vector<128x128xbf16>, vector<16x128xf32> -> vector<16x128xf32>
    %30 = arith.addf %7, %29 : vector<16x128xf32>
    %c0_12 = arith.constant 0 : index
    %c0_13 = arith.constant 0 : index
    %31 = vector.load %arg7[%c0_12, %c0_13] : memref<1x128xf32, #tpu.memory_space<vmem>>, vector<1x128xf32>
    %c0_14 = arith.constant 0 : index
    %c0_15 = arith.constant 0 : index
    %32 = vector.load %arg8[%c0_14, %c0_15] : memref<1x128xf32, #tpu.memory_space<vmem>>, vector<1x128xf32>
    %cst_16 = arith.constant dense<0.000000e+00> : vector<16xf32>
    %33 = vector.multi_reduction <add>, %30, %cst_16 [1] : vector<16x128xf32> to vector<16xf32>
    %34 = vector.shape_cast %33 : vector<16xf32> to vector<16x1xf32>
    %cst_17 = arith.constant 1.280000e+02 : f32
    %35 = vector.broadcast %cst_17 : f32 to vector<16x1xf32>
    %36 = arith.divf %34, %35 : vector<16x1xf32>
    %37 = vector.broadcast %36 : vector<16x1xf32> to vector<16x128xf32>
    %38 = arith.subf %30, %37 : vector<16x128xf32>
    %39 = arith.mulf %38, %38 : vector<16x128xf32>
    %cst_18 = arith.constant dense<0.000000e+00> : vector<16xf32>
    %40 = vector.multi_reduction <add>, %39, %cst_18 [1] : vector<16x128xf32> to vector<16xf32>
    %41 = vector.shape_cast %40 : vector<16xf32> to vector<16x1xf32>
    %cst_19 = arith.constant 1.280000e+02 : f32
    %42 = vector.broadcast %cst_19 : f32 to vector<16x1xf32>
    %43 = arith.divf %41, %42 : vector<16x1xf32>
    %44 = vector.broadcast %36 : vector<16x1xf32> to vector<16x128xf32>
    %45 = arith.subf %30, %44 : vector<16x128xf32>
    %cst_20 = arith.constant 9.99999974E-6 : f32
    %46 = vector.broadcast %cst_20 : f32 to vector<16x1xf32>
    %47 = arith.addf %43, %46 : vector<16x1xf32>
    %48 = math.rsqrt %47 : vector<16x1xf32>
    %49 = vector.broadcast %48 : vector<16x1xf32> to vector<16x128xf32>
    %50 = arith.mulf %45, %49 : vector<16x128xf32>
    %51 = vector.broadcast %31 : vector<1x128xf32> to vector<16x128xf32>
    %52 = arith.mulf %50, %51 : vector<16x128xf32>
    %53 = vector.broadcast %32 : vector<1x128xf32> to vector<16x128xf32>
    %54 = arith.addf %52, %53 : vector<16x128xf32>
    %55 = arith.truncf %54 : vector<16x128xf32> to vector<16x128xbf16>
    %c0_21 = arith.constant 0 : index
    %c0_22 = arith.constant 0 : index
    %56 = vector.load %arg9[%c0_21, %c0_22] : memref<128x256xbf16, #tpu.memory_space<vmem>>, vector<128x256xbf16>
    %cst_23 = arith.constant dense<0.000000e+00> : vector<16x256xf32>
    %57 = tpu.matmul %55, %56, %cst_23 {dimension_numbers = #tpu.dot_dimension_numbers<[1], [0], [0], [1], [0, 0, 1, 1], [], []>} : vector<16x128xbf16>, vector<128x256xbf16>, vector<16x256xf32> -> vector<16x256xf32>
    %c0_24 = arith.constant 0 : index
    %c0_25 = arith.constant 0 : index
    %58 = vector.load %arg10[%c0_24, %c0_25] : memref<1x256xf32, #tpu.memory_space<vmem>>, vector<1x256xf32>
    %59 = vector.broadcast %58 : vector<1x256xf32> to vector<16x256xf32>
    %60 = arith.addf %57, %59 : vector<16x256xf32>
    %61 = arith.mulf %60, %60 : vector<16x256xf32>
    %62 = arith.mulf %60, %61 : vector<16x256xf32>
    %cst_26 = arith.constant 4.471500e-02 : f32
    %63 = vector.broadcast %cst_26 : f32 to vector<16x256xf32>
    %64 = arith.mulf %63, %62 : vector<16x256xf32>
    %65 = arith.addf %60, %64 : vector<16x256xf32>
    %cst_27 = arith.constant 0.797884583 : f32
    %66 = vector.broadcast %cst_27 : f32 to vector<16x256xf32>
    %67 = arith.mulf %66, %65 : vector<16x256xf32>
    %68 = math.tanh %67 : vector<16x256xf32>
    %cst_28 = arith.constant 1.000000e+00 : f32
    %69 = vector.broadcast %cst_28 : f32 to vector<16x256xf32>
    %70 = arith.addf %69, %68 : vector<16x256xf32>
    %cst_29 = arith.constant 5.000000e-01 : f32
    %71 = vector.broadcast %cst_29 : f32 to vector<16x256xf32>
    %72 = arith.mulf %71, %70 : vector<16x256xf32>
    %73 = arith.mulf %60, %72 : vector<16x256xf32>
    %74 = arith.truncf %73 : vector<16x256xf32> to vector<16x256xbf16>
    %c0_30 = arith.constant 0 : index
    %c0_31 = arith.constant 0 : index
    %75 = vector.load %arg11[%c0_30, %c0_31] : memref<256x128xbf16, #tpu.memory_space<vmem>>, vector<256x128xbf16>
    %cst_32 = arith.constant dense<0.000000e+00> : vector<16x128xf32>
    %76 = tpu.matmul %74, %75, %cst_32 {dimension_numbers = #tpu.dot_dimension_numbers<[1], [0], [0], [1], [0, 0, 1, 1], [], []>} : vector<16x256xbf16>, vector<256x128xbf16>, vector<16x128xf32> -> vector<16x128xf32>
    %c0_33 = arith.constant 0 : index
    %c0_34 = arith.constant 0 : index
    %77 = vector.load %arg12[%c0_33, %c0_34] : memref<1x128xf32, #tpu.memory_space<vmem>>, vector<1x128xf32>
    %78 = vector.broadcast %77 : vector<1x128xf32> to vector<16x128xf32>
    %79 = arith.addf %76, %78 : vector<16x128xf32>
    %80 = arith.addf %30, %79 : vector<16x128xf32>
    %c0_35 = arith.constant 0 : index
    %c0_36 = arith.constant 0 : index
    %81 = vector.load %arg13[%c0_35, %c0_36] : memref<1x128xf32, #tpu.memory_space<vmem>>, vector<1x128xf32>
    %82 = vector.broadcast %81 : vector<1x128xf32> to vector<16x128xf32>
    %83 = arith.mulf %80, %82 : vector<16x128xf32>
    %cst_37 = arith.constant dense<0.000000e+00> : vector<16xf32>
    %84 = vector.multi_reduction <add>, %83, %cst_37 [1] : vector<16x128xf32> to vector<16xf32>
    %85 = vector.shape_cast %84 : vector<16xf32> to vector<16x1xf32>
    %c0_38 = arith.constant 0 : index
    %c0_39 = arith.constant 0 : index
    %86 = memref.load %arg14[%c0_38, %c0_39] : memref<1x1xf32, #tpu.memory_space<smem>>
    %87 = vector.broadcast %86 : f32 to vector<16x1xf32>
    %88 = arith.addf %85, %87 : vector<16x1xf32>
    %c0_40 = arith.constant 0 : index
    %c0_41 = arith.constant 0 : index
    %c0_42 = arith.constant 0 : index
    %89 = vector.load %arg15[%c0_40, %c0_41, %c0_42] : memref<1x16x1xf32, #tpu.memory_space<vmem>>, vector<1x16x1xf32>
    %90 = vector.shape_cast %89 : vector<1x16x1xf32> to vector<16x1xf32>
    %91 = vector.shape_cast %88 : vector<16x1xf32> to vector<1x16x1xf32>
    tpu.vector_store %arg15[%c0_40, %c0_41, %c0_42], %91 {strides = array<i32>} : memref<1x16x1xf32, #tpu.memory_space<vmem>>, vector<1x16x1xf32>,
    return
  }
  func.func @transform_0(%arg0: i32, %arg1: i32) -> (i32, i32, i32) {
    %c0_i32 = arith.constant 0 : i32
    %c0_i32_0 = arith.constant 0 : i32
    %c0_i32_1 = arith.constant 0 : i32
    return %arg0, %c0_i32, %c0_i32_0 : i32, i32, i32
  }
  func.func @transform_1(%arg0: i32, %arg1: i32) -> (i32, i32) {
    %c0_i32 = arith.constant 0 : i32
    %c0_i32_0 = arith.constant 0 : i32
    %c0_i32_1 = arith.constant 0 : i32
    return %c0_i32, %c0_i32_0 : i32, i32
  }
  func.func @transform_2(%arg0: i32, %arg1: i32) -> (i32, i32) {
    %c0_i32 = arith.constant 0 : i32
    %c0_i32_0 = arith.constant 0 : i32
    %c0_i32_1 = arith.constant 0 : i32
    return %c0_i32, %c0_i32_0 : i32, i32
  }
  func.func @transform_3(%arg0: i32, %arg1: i32) -> (i32, i32) {
    %c0_i32 = arith.constant 0 : i32
    %c0_i32_0 = arith.constant 0 : i32
    %c0_i32_1 = arith.constant 0 : i32
    return %c0_i32, %c0_i32_0 : i32, i32
  }
  func.func @transform_4(%arg0: i32, %arg1: i32) -> (i32, i32) {
    %c0_i32 = arith.constant 0 : i32
    %c0_i32_0 = arith.constant 0 : i32
    %c0_i32_1 = arith.constant 0 : i32
    return %c0_i32, %c0_i32_0 : i32, i32
  }
  func.func @transform_5(%arg0: i32, %arg1: i32) -> (i32, i32) {
    %c0_i32 = arith.constant 0 : i32
    %c0_i32_0 = arith.constant 0 : i32
    %c0_i32_1 = arith.constant 0 : i32
    return %c0_i32, %c0_i32_0 : i32, i32
  }
  func.func @transform_6(%arg0: i32, %arg1: i32) -> (i32, i32) {
    %c0_i32 = arith.constant 0 : i32
    %c0_i32_0 = arith.constant 0 : i32
    %c0_i32_1 = arith.constant 0 : i32
    return %c0_i32, %c0_i32_0 : i32, i32
  }
  func.func @transform_7(%arg0: i32, %arg1: i32) -> (i32, i32) {
    %c0_i32 = arith.constant 0 : i32
    %c0_i32_0 = arith.constant 0 : i32
    %c0_i32_1 = arith.constant 0 : i32
    return %c0_i32, %c0_i32_0 : i32, i32
  }
  func.func @transform_8(%arg0: i32, %arg1: i32) -> (i32, i32) {
    %c0_i32 = arith.constant 0 : i32
    %c0_i32_0 = arith.constant 0 : i32
    %c0_i32_1 = arith.constant 0 : i32
    return %c0_i32, %c0_i32_0 : i32, i32
  }
  func.func @transform_9(%arg0: i32, %arg1: i32) -> (i32, i32) {
    %c0_i32 = arith.constant 0 : i32
    %c0_i32_0 = arith.constant 0 : i32
    %c0_i32_1 = arith.constant 0 : i32
    return %c0_i32, %c0_i32_0 : i32, i32
  }
  func.func @transform_10(%arg0: i32, %arg1: i32) -> (i32, i32) {
    %c0_i32 = arith.constant 0 : i32
    %c0_i32_0 = arith.constant 0 : i32
    %c0_i32_1 = arith.constant 0 : i32
    return %c0_i32, %c0_i32_0 : i32, i32
  }
  func.func @transform_11(%arg0: i32, %arg1: i32) -> (i32, i32) {
    %c0_i32 = arith.constant 0 : i32
    %c0_i32_0 = arith.constant 0 : i32
    %c0_i32_1 = arith.constant 0 : i32
    return %c0_i32, %c0_i32_0 : i32, i32
  }
  func.func @transform_12(%arg0: i32, %arg1: i32) -> (i32, i32) {
    %c0_i32 = arith.constant 0 : i32
    %c0_i32_0 = arith.constant 0 : i32
    %c0_i32_1 = arith.constant 0 : i32
    return %c0_i32, %c0_i32_0 : i32, i32
  }
  func.func @transform_13(%arg0: i32, %arg1: i32) -> (i32, i32, i32) {
    %c0_i32 = arith.constant 0 : i32
    %c0_i32_0 = arith.constant 0 : i32
    return %arg0, %arg1, %c0_i32 : i32, i32, i32
  }
}

module attributes {stable_mosaic.version = 11 : i64} {
  func.func @_decode_seg_kernel(%arg0: i32, %arg1: i32, %arg2: memref<1x4x4xf32, #tpu.memory_space<vmem>>, %arg3: memref<1x4x16x16xf32, #tpu.memory_space<vmem>>, %arg4: memref<16x4xf32, #tpu.memory_space<vmem>>, %arg5: memref<4x16xf32, #tpu.memory_space<vmem>>, %arg6: memref<1x1xf32, #tpu.memory_space<smem>>, %arg7: memref<1x1xf32, #tpu.memory_space<smem>>, %arg8: memref<1x16x16xf32, #tpu.memory_space<vmem>>) attributes {dimension_semantics = [#tpu.dimension_semantics<parallel>, #tpu.dimension_semantics<parallel>], iteration_bounds = array<i64: 2, 1>, scalar_prefetch = 0 : i64, scratch_operands = 0 : i64, tpu.core_type = #tpu.core_type<tc>, window_params = [{transform_indices = @transform_0, window_bounds = array<i64: 1, 4, 4>}, {transform_indices = @transform_1, window_bounds = array<i64: 1, 4, 16, 16>}, {pipeline_mode = #tpu.pipeline_mode<synchronous>, transform_indices = @transform_2, window_bounds = array<i64: 16, 4>}, {pipeline_mode = #tpu.pipeline_mode<synchronous>, transform_indices = @transform_3, window_bounds = array<i64: 4, 16>}, {transform_indices = @transform_4, window_bounds = array<i64: 1, 1>}, {transform_indices = @transform_5, window_bounds = array<i64: 1, 1>}, {transform_indices = @transform_6, window_bounds = array<i64: 1, 16, 16>}]} {
    %c0 = arith.constant 0 : index
    %c0_0 = arith.constant 0 : index
    %c0_1 = arith.constant 0 : index
    %0 = vector.load %arg2[%c0, %c0_0, %c0_1] : memref<1x4x4xf32, #tpu.memory_space<vmem>>, vector<1x4x4xf32>
    %1 = vector.shape_cast %0 : vector<1x4x4xf32> to vector<4x4xf32>
    %c0_2 = arith.constant 0 : index
    %c0_3 = arith.constant 0 : index
    %c0_4 = arith.constant 0 : index
    %c0_5 = arith.constant 0 : index
    %2 = vector.load %arg3[%c0_2, %c0_3, %c0_4, %c0_5] : memref<1x4x16x16xf32, #tpu.memory_space<vmem>>, vector<1x4x16x16xf32>
    %3 = vector.shape_cast %2 : vector<1x4x16x16xf32> to vector<4x16x16xf32>
    %cst = arith.constant dense<0.000000e+00> : vector<16x16xf32>
    %4 = vector.multi_reduction <add>, %3, %cst [0] : vector<4x16x16xf32> to vector<16x16xf32>
    %cst_6 = arith.constant 4.000000e+00 : f32
    %5 = vector.broadcast %cst_6 : f32 to vector<16x16xf32>
    %6 = arith.divf %4, %5 : vector<16x16xf32>
    %c0_7 = arith.constant 0 : index
    %c0_8 = arith.constant 0 : index
    %7 = vector.load %arg4[%c0_7, %c0_8] : memref<16x4xf32, #tpu.memory_space<vmem>>, vector<16x4xf32>
    %cst_9 = arith.constant dense<0.000000e+00> : vector<16x4xf32>
    %8 = tpu.matmul %7, %1, %cst_9 {dimension_numbers = #tpu.dot_dimension_numbers<[1], [0], [0], [1], [0, 0, 1, 1], [], []>} : vector<16x4xf32>, vector<4x4xf32>, vector<16x4xf32> -> vector<16x4xf32>
    %c0_10 = arith.constant 0 : index
    %c0_11 = arith.constant 0 : index
    %9 = vector.load %arg5[%c0_10, %c0_11] : memref<4x16xf32, #tpu.memory_space<vmem>>, vector<4x16xf32>
    %cst_12 = arith.constant dense<0.000000e+00> : vector<16x16xf32>
    %10 = tpu.matmul %8, %9, %cst_12 {dimension_numbers = #tpu.dot_dimension_numbers<[1], [0], [0], [1], [0, 0, 1, 1], [], []>} : vector<16x4xf32>, vector<4x16xf32>, vector<16x16xf32> -> vector<16x16xf32>
    %11 = arith.addf %10, %6 : vector<16x16xf32>
    %c0_13 = arith.constant 0 : index
    %c0_14 = arith.constant 0 : index
    %12 = memref.load %arg6[%c0_13, %c0_14] : memref<1x1xf32, #tpu.memory_space<smem>>
    %13 = vector.broadcast %12 : f32 to vector<16x16xf32>
    %14 = arith.mulf %11, %13 : vector<16x16xf32>
    %c0_15 = arith.constant 0 : index
    %c0_16 = arith.constant 0 : index
    %15 = memref.load %arg7[%c0_15, %c0_16] : memref<1x1xf32, #tpu.memory_space<smem>>
    %16 = vector.broadcast %15 : f32 to vector<16x16xf32>
    %17 = arith.addf %14, %16 : vector<16x16xf32>
    %c0_17 = arith.constant 0 : index
    %c0_18 = arith.constant 0 : index
    %c0_19 = arith.constant 0 : index
    %18 = vector.load %arg8[%c0_17, %c0_18, %c0_19] : memref<1x16x16xf32, #tpu.memory_space<vmem>>, vector<1x16x16xf32>
    %19 = vector.shape_cast %18 : vector<1x16x16xf32> to vector<16x16xf32>
    %20 = vector.shape_cast %17 : vector<16x16xf32> to vector<1x16x16xf32>
    tpu.vector_store %arg8[%c0_17, %c0_18, %c0_19], %20 {strides = array<i32>} : memref<1x16x16xf32, #tpu.memory_space<vmem>>, vector<1x16x16xf32>,
    return
  }
  func.func @transform_0(%arg0: i32, %arg1: i32) -> (i32, i32, i32) {
    %c0_i32 = arith.constant 0 : i32
    %c0_i32_0 = arith.constant 0 : i32
    return %arg0, %arg1, %c0_i32 : i32, i32, i32
  }
  func.func @transform_1(%arg0: i32, %arg1: i32) -> (i32, i32, i32, i32) {
    %c0_i32 = arith.constant 0 : i32
    %c0_i32_0 = arith.constant 0 : i32
    %c0_i32_1 = arith.constant 0 : i32
    return %arg0, %c0_i32, %arg1, %c0_i32_0 : i32, i32, i32, i32
  }
  func.func @transform_2(%arg0: i32, %arg1: i32) -> (i32, i32) {
    %c0_i32 = arith.constant 0 : i32
    %c0_i32_0 = arith.constant 0 : i32
    %c0_i32_1 = arith.constant 0 : i32
    return %c0_i32, %c0_i32_0 : i32, i32
  }
  func.func @transform_3(%arg0: i32, %arg1: i32) -> (i32, i32) {
    %c0_i32 = arith.constant 0 : i32
    %c0_i32_0 = arith.constant 0 : i32
    %c0_i32_1 = arith.constant 0 : i32
    return %c0_i32, %c0_i32_0 : i32, i32
  }
  func.func @transform_4(%arg0: i32, %arg1: i32) -> (i32, i32) {
    %c0_i32 = arith.constant 0 : i32
    %c0_i32_0 = arith.constant 0 : i32
    %c0_i32_1 = arith.constant 0 : i32
    return %c0_i32, %c0_i32_0 : i32, i32
  }
  func.func @transform_5(%arg0: i32, %arg1: i32) -> (i32, i32) {
    %c0_i32 = arith.constant 0 : i32
    %c0_i32_0 = arith.constant 0 : i32
    %c0_i32_1 = arith.constant 0 : i32
    return %c0_i32, %c0_i32_0 : i32, i32
  }
  func.func @transform_6(%arg0: i32, %arg1: i32) -> (i32, i32, i32) {
    %c0_i32 = arith.constant 0 : i32
    %c0_i32_0 = arith.constant 0 : i32
    return %arg0, %arg1, %c0_i32 : i32, i32, i32
  }
}

</mosaic_0001>

<llo_original>
// kernel: trans_unet_forward.3
$region0: #{trans_unet_forward.3}
  #allocation0 [shape = 'u32[]', space=smem, size = 0x4, offset = 0x4, fixed_abs, tag = 'smem constant byte address 0x4 - core index']
  #allocation1 [shape = 'u32[72,128]{1,0:T(1,128)}', space=vmem, size = 0x9000, scoped, tag = 'internal scratch']
  %s0 = inlined_call_operand.vmem [shape: f32[32,64], index: 0, kind: input, shape index: {}]
  %s1 = inlined_call_operand.vmem [shape: bf16[64,128], index: 1, kind: input, shape index: {}]
  %s2 = inlined_call_operand.vmem [shape: f32[1,128], index: 2, kind: input, shape index: {}]
  %s3 = inlined_call_operand.vmem [shape: f32[32,128], index: 3, kind: output, shape index: {}]
  %s4 = sld [smem:[#allocation0]]
  $region45: #{trans_unet_forward.3} parent=0
    _
  %s6 = ssub.s32 1, %s4
  %s7 = scalar_select 0, %s6, %s4
  loop: start=0, step=1, limit=4
  $region2: #{trans_unet_forward.3} parent=0 // loop_pre_header
    _
  $region3: #{trans_unet_forward.3} parent=0 // loop_header
    %s9 = sphi 0, %s13
    %p10 = scmp.ge.s32.totalorder %s9, 4
    %s19 = sphi 0, %s21
    %s22 = sphi 0, %s19
    %s23 = sphi 0, %s22
    %s39 = sphi 0, %s23
    %s43 = sphi 0, %s43
    %s45 = sphi 0, %s43
    %s46 = sphi 0, %s45
    %s60 = sphi 0, %s46
    %s64 = sphi 0, %s64
    %s66 = sphi 0, %s64
    %s67 = sphi 0, %s66
    %s81 = sphi 0, %s67
    %s87 = sphi 0, %s89
    %s90 = sphi 0, %s87
    %s91 = sphi 0, %s90
    %s107 = sphi 0, %s91
  $region4: #{trans_unet_forward.3} parent=0 // loop_header_branch
    %12 = sbr.rel (%p10) target = $region8
  $region5: #{trans_unet_forward.3} parent=0 // loop_body
    %s14 = ssub.s32 %s9, 1
    %s15 = ssub.s32 %s9, 2
    %s16 = sadd.s32 %s9, 1
    %s17 = ssub.s32 %s9, %s16
    %p18 = scmp.eq.s32.totalorder %s17, 0
    %s20 = sadd.s32 %s19, 1
    %s21 = scalar_select %p18, %s19, %s20
    %p24 = pneg %p18
    %p25 = scmp.eq.s32.totalorder %s9, 1
    %p26 = por %p24, %p25
    %p27 = scmp.ne.s32.totalorder %s19, %s22
    %p28 = scmp.eq.s32.totalorder %s9, 0
    %p29 = por %p27, %p28
    %p30 = scmp.ne.s32.totalorder %s19, %s22
    %p31 = scmp.eq.s32.totalorder %s14, 1
    %p32 = por %p30, %p31
    %p33 = scmp.ne.s32.totalorder %s22, %s23
    %p34 = scmp.eq.s32.totalorder %s14, 0
    %p35 = por %p33, %p34
    %p36 = scmp.ne.s32.totalorder %s22, %s23
    %p37 = scmp.eq.s32.totalorder %s15, 1
    %p38 = por %p36, %p37
    %p40 = scmp.ne.s32.totalorder %s23, %s39
    %p41 = scmp.eq.s32.totalorder %s15, 0
    %p42 = por %p40, %p41
    %s44 = sadd.s32 %s43, 1
    %p47 = scmp.eq.s32.totalorder %s9, 1
    %p48 = scmp.ne.s32.totalorder %s43, %s45
    %p49 = scmp.eq.s32.totalorder %s9, 0
    %p50 = por %p48, %p49
    %p51 = scmp.ne.s32.totalorder %s43, %s45
    %p52 = scmp.eq.s32.totalorder %s14, 1
    %p53 = por %p51, %p52
    %p54 = scmp.ne.s32.totalorder %s45, %s46
    %p55 = scmp.eq.s32.totalorder %s14, 0
    %p56 = por %p54, %p55
    %p57 = scmp.ne.s32.totalorder %s45, %s46
    %p58 = scmp.eq.s32.totalorder %s15, 1
    %p59 = por %p57, %p58
    %p61 = scmp.ne.s32.totalorder %s46, %s60
    %p62 = scmp.eq.s32.totalorder %s15, 0
    %p63 = por %p61, %p62
    %s65 = sadd.s32 %s64, 1
    %p68 = scmp.eq.s32.totalorder %s9, 1
    %p69 = scmp.ne.s32.totalorder %s64, %s66
    %p70 = scmp.eq.s32.totalorder %s9, 0
    %p71 = por %p69, %p70
    %p72 = scmp.ne.s32.totalorder %s64, %s66
    %p73 = scmp.eq.s32.totalorder %s14, 1
    %p74 = por %p72, %p73
    %p75 = scmp.ne.s32.totalorder %s66, %s67
    %p76 = scmp.eq.s32.totalorder %s14, 0
    %p77 = por %p75, %p76
    %p78 = scmp.ne.s32.totalorder %s66, %s67
    %p79 = scmp.eq.s32.totalorder %s15, 1
    %p80 = por %p78, %p79
    %p82 = scmp.ne.s32.totalorder %s67, %s81
    %p83 = scmp.eq.s32.totalorder %s15, 0
    %p84 = por %p82, %p83
    %s85 = ssub.s32 %s9, %s16
    %p86 = scmp.eq.s32.totalorder %s85, 0
    %s88 = sadd.s32 %s87, 1
    %s89 = scalar_select %p86, %s87, %s88
    %p92 = pneg %p86
    %p93 = scmp.eq.s32.totalorder %s9, 1
    %p94 = por %p92, %p93
    %p95 = scmp.ne.s32.totalorder %s87, %s90
    %p96 = scmp.eq.s32.totalorder %s9, 0
    %p97 = por %p95, %p96
    %p98 = scmp.ne.s32.totalorder %s87, %s90
    %p99 = scmp.eq.s32.totalorder %s14, 1
    %p100 = por %p98, %p99
    %p101 = scmp.ne.s32.totalorder %s90, %s91
    %p102 = scmp.eq.s32.totalorder %s14, 0
    %p103 = por %p101, %p102
    %p104 = scmp.ne.s32.totalorder %s90, %s91
    %p105 = scmp.eq.s32.totalorder %s15, 1
    %p106 = por %p104, %p105
    %p108 = scmp.ne.s32.totalorder %s91, %s107
    %p109 = scmp.eq.s32.totalorder %s15, 0
    %p110 = por %p108, %p109
    %p111 = scmp.le.s32.totalorder 1, %s9
    %p112 = scmp.lt.s32.totalorder %s9, 3
    %p113 = pnand %p111, %p112
    %p114 = pneg %p113
    // Predicated region
    $region9: #{trans_unet_forward.3} parent=5 // pred_check
      _
    $region10: #{trans_unet_forward.3} parent=5 // pred_check_branch
      %116 = sbr.rel (%p113) target = $region12
    $region11: #{trans_unet_forward.3} parent=5 // pred_region
      %s117 = ssub.s32 %s9, 1
      // Predicated region
      $region13: #{trans_unet_forward.3} parent=11 // pred_check
        %p118 = pneg %p56
      $region14: #{trans_unet_forward.3} parent=11 // pred_check_branch
        %120 = sbr.rel (%p118) target = $region16
      $region15: #{trans_unet_forward.3} parent=11 // pred_region
        _
      $region16: #{trans_unet_forward.3} parent=11 // pred_fallthru
        _
      // Predicated region
      $region17: #{trans_unet_forward.3} parent=11 // pred_check
        %p121 = pneg %p77
      $region18: #{trans_unet_forward.3} parent=11 // pred_check_branch
        %123 = sbr.rel (%p121) target = $region20
      $region19: #{trans_unet_forward.3} parent=11 // pred_region
        _
      $region20: #{trans_unet_forward.3} parent=11 // pred_fallthru
        _
    $region12: #{trans_unet_forward.3} parent=5 // pred_fallthru
      _
    %p124 = scmp.lt.s32.totalorder %s9, 2
    // Predicated region
    $region21: #{trans_unet_forward.3} parent=5 // pred_check
      %p125 = pneg %p124
    $region22: #{trans_unet_forward.3} parent=5 // pred_check_branch
      %127 = sbr.rel (%p125) target = $region24
    $region23: #{trans_unet_forward.3} parent=5 // pred_region
      // Predicated region
      $region25: #{trans_unet_forward.3} parent=23 // pred_check
        %p128 = pneg %p29
      $region26: #{trans_unet_forward.3} parent=23 // pred_check_branch
        %130 = sbr.rel (%p128) target = $region28
      $region27: #{trans_unet_forward.3} parent=23 // pred_region
        %s131 = smul.u32 2, %s9
        %p132 = scmp.lt.s32.totalorder %s131, 3
        %s133 = scalar_select %p132, %s131, 3
        %s134 = smul.addr %s133, 8
        %s135 = scalar_lea.vmem %s0, %s134
        %s136 = smul.u32 2, %s9
      $region28: #{trans_unet_forward.3} parent=23 // pred_fallthru
        _
    $region24: #{trans_unet_forward.3} parent=5 // pred_fallthru
      _
    %p137 = scmp.le.s32.totalorder 1, %s9
    %p138 = scmp.lt.s32.totalorder %s9, 3
    %p139 = pnand %p137, %p138
    %p140 = pneg %p139
    // Predicated region
    $region29: #{trans_unet_forward.3} parent=5 // pred_check
      _
    $region30: #{trans_unet_forward.3} parent=5 // pred_check_branch
      %142 = sbr.rel (%p139) target = $region32
    $region31: #{trans_unet_forward.3} parent=5 // pred_region
      %s143 = ssub.s32 %s9, 1
      %s144 = smul.u32 2, %s14
      %p145 = scmp.lt.s32.totalorder %s144, 3
      %s146 = scalar_select %p145, %s144, 3
      %s147 = smul.addr %s146, 8
      %s148 = scalar_lea.vmem %s0, %s147
      %p149 = pneg %p35
      %p150 = pneg %p32
      %p151 = pneg %p56
      %p152 = pneg %p53
      %p153 = pneg %p77
      %p154 = pneg %p74
      %p155 = pneg %p103
      %p156 = pneg %p100
      %s157 = smul.u32 2, %s14
      %p158 = scmp.lt.s32.totalorder %s157, 3
      %s159 = scalar_select %p158, %s157, 3
      %s160 = smul.addr %s159, 8
      %s161 = scalar_lea.vmem %s3, %s160
      %s162 = smul.u32 2, %s14
      %p163 = scmp.lt.s32.totalorder %s162, 3
      %s164 = scalar_select %p163, %s162, 3
      %s165 = smul.addr %s164, 8
      %s166 = scalar_lea.vmem %s0, %s165
      %s167 = smul.u32 2, %s14
      %s168 = smul.u32 2, %s14
      %p169 = scmp.lt.s32.totalorder %s168, 3
      %s170 = scalar_select %p169, %s168, 3
      %s171 = smul.addr %s170, 8
      %s172 = scalar_lea.vmem %s3, %s171
      %s173 = smul.u32 2, %s14
      %v175 = vld [vmem:[%s166] sm:$0xff]
      %v176 = vld [vmem:[%s166 + $0x8] sm:$0xff]
      %v177 = vpack.c.bf16 %v176, %v175
      %v178 = vld [vmem:[%s1] sm:$0xf]
      %v179 = vld [vmem:[%s1 + $0x4] sm:$0xf]
      %v180 = vld [vmem:[%s1 + $0x8] sm:$0xf]
      %v181 = vld [vmem:[%s1 + $0xc] sm:$0xf]
      %v182 = vld [vmem:[%s1 + $0x10] sm:$0xf]
      %v183 = vld [vmem:[%s1 + $0x14] sm:$0xf]
      %v184 = vld [vmem:[%s1 + $0x18] sm:$0xf]
      %v185 = vld [vmem:[%s1 + $0x1c] sm:$0xf]
      %v186 = vld [vmem:[%s2] sm:$0x1]
      %v188 = vperm.slane %v186, 0
      %v198 = vunpack.c.l.b16 %v178
      %v199 = vunpack.c.l.b16 %v179
      %v200 = vunpack.c.l.b16 %v180
      %v201 = vunpack.c.l.b16 %v181
      %v202 = vunpack.c.l.b16 %v182
      %v203 = vunpack.c.l.b16 %v183
      %v204 = vunpack.c.l.b16 %v184
      %v205 = vunpack.c.l.b16 %v185
      %v206 = vpack.c.b16 %v199, %v198
      %v207 = vpack.c.b16 %v201, %v200
      %v208 = vpack.c.b16 %v203, %v202
      %v209 = vpack.c.b16 %v205, %v204
      %vm214 = vcmask 523264
      %v216 = vsel %vm214, %v177, 0
      %218 = vmatpush.bf16.msra.mxu0 0
      %219 = vmatpush.bf16.msra.mxu0 0
      %220 = vmatpush.bf16.msra.mxu0 0
      %221 = vmatpush.bf16.msra.mxu0 0
      %222 = vmatpush.bf16.msra.mxu0 %v209
      %223 = vmatpush.bf16.msra.mxu0 %v208
      %224 = vmatpush.bf16.msra.mxu0 %v207
      %225 = vmatpush.bf16.msra.mxu0 %v206
      %226 = vmatmul.bf16.gmra.mxu0 %v216
      %v227 = vpop.f32.mrf.mxu0
      %v228 = vadd.f32 %v188, %v227
      %v229 = vpop.f32.mrf.mxu0
      %v230 = vadd.f32 %v188, %v229
      %231 = vdwg.mxu0
      %232 = vst [vmem:[%s172] sm:$0xff] %v228
      %233 = vst [vmem:[%s172 + $0x8] sm:$0xff] %v230
      %s234 = smul.u32 2, %s14
      %p235 = scmp.lt.s32.totalorder %s234, 3
      %s236 = scalar_select %p235, %s234, 3
      %s237 = smul.addr %s236, 8
      %s238 = scalar_lea.vmem %s3, %s237
      // Predicated region
      $region33: #{trans_unet_forward.3} parent=31 // pred_check
        %p239 = pneg %p100
      $region34: #{trans_unet_forward.3} parent=31 // pred_check_branch
        %241 = sbr.rel (%p239) target = $region36
      $region35: #{trans_unet_forward.3} parent=31 // pred_region
        %s242 = smul.u32 2, %s14
      $region36: #{trans_unet_forward.3} parent=31 // pred_fallthru
        _
    $region32: #{trans_unet_forward.3} parent=5 // pred_fallthru
      _
    %p243 = scmp.le.s32.totalorder 2, %s9
    // Predicated region
    $region37: #{trans_unet_forward.3} parent=5 // pred_check
      %p244 = pneg %p243
    $region38: #{trans_unet_forward.3} parent=5 // pred_check_branch
      %246 = sbr.rel (%p244) target = $region40
    $region39: #{trans_unet_forward.3} parent=5 // pred_region
      %s247 = ssub.s32 %s9, 2
      // Predicated region
      $region41: #{trans_unet_forward.3} parent=39 // pred_check
        %p248 = pneg %p106
      $region42: #{trans_unet_forward.3} parent=39 // pred_check_branch
        %250 = sbr.rel (%p248) target = $region44
      $region43: #{trans_unet_forward.3} parent=39 // pred_region
        %s251 = smul.u32 2, %s15
        %p252 = scmp.lt.s32.totalorder %s251, 3
        %s253 = scalar_select %p252, %s251, 3
        %s254 = smul.addr %s253, 8
        %s255 = scalar_lea.vmem %s3, %s254
      $region44: #{trans_unet_forward.3} parent=39 // pred_fallthru
        _
    $region40: #{trans_unet_forward.3} parent=5 // pred_fallthru
      _
  $region6: #{trans_unet_forward.3} parent=0 // loop_footer
    %s13 = sadd.s32 1, %s9
  $region7: #{trans_unet_forward.3} parent=0 // loop_footer_branch
    %8 = sbr.rel target = $region3
  $region8: #{trans_unet_forward.3} parent=0 // loop_exit
    _

// kernel: trans_unet_forward.5
$region0: #{trans_unet_forward.5}
  #allocation0 [shape = 'u32[]', space=smem, size = 0x4, offset = 0x4, fixed_abs, tag = 'smem constant byte address 0x4 - core index']
  #allocation1 [shape = 'u32[72,128]{1,0:T(1,128)}', space=vmem, size = 0x9000, scoped, tag = 'internal scratch']
  #allocation2 [shape = 'f32[1,1]{1,0:T(1,128)S(6)}', space=smem, size = 0x200, scoped, tag = 'scoped memory for trans_unet_forward.5']
  #allocation3 [shape = 'f32[1,1]{1,0:T(1,128)S(6)}', space=smem, size = 0x200, scoped, tag = 'scoped memory for trans_unet_forward.5']
  %s0 = inlined_call_operand.vmem [shape: f32[2,4,4], index: 0, kind: input, shape index: {}]
  %s1 = inlined_call_operand.vmem [shape: f32[2,4,16,16], index: 1, kind: input, shape index: {}]
  %s2 = inlined_call_operand.vmem [shape: f32[16,4], index: 2, kind: input, shape index: {}]
  %s3 = inlined_call_operand.vmem [shape: f32[4,16], index: 3, kind: input, shape index: {}]
  %s4 = inlined_call_operand.<no memory space> [shape: f32[1,1], index: 4, kind: input, shape index: {}]
  %s5 = inlined_call_operand.<no memory space> [shape: f32[1,1], index: 5, kind: input, shape index: {}]
  %s6 = inlined_call_operand.hbm [shape: f32[2,16,16], index: 6, kind: output, shape index: {}]
  %s7 = sld [smem:[#allocation0]]
  $region57: #{trans_unet_forward.5} parent=0
    _
  %s9 = ssub.s32 1, %s7
  %s10 = scalar_select 0, %s9, %s7
  %11 = sst [smem:[#allocation2]] %s4
  %12 = sst [smem:[#allocation3]] %s5
  $region1: #{trans_unet_forward.5} parent=0
    #allocation4 [shape = 'u8[16384]{0}', space=vmem, size = 0x4000, scoped, tag = 'output window, operand 0']
    #allocation5 [shape = 's32[2]{0}', space=sflag, size = 0x8, scoped, tag = 'scoped memory for trans_unet_forward.5']
    %13 = vsyncpa [#allocation5], 0
    %s14 = scalar_lea.sflag [#allocation5], 1
    %15 = vsyncpa %s14, 0
    loop: start=0, step=1, limit=4
    $region2: #{trans_unet_forward.5} parent=1 // loop_pre_header
      _
    $region3: #{trans_unet_forward.5} parent=1 // loop_header
      %s17 = sphi 0, %s21
      %p18 = scmp.ge.s32.totalorder %s17, 4
      %s24 = sphi 0, %s36
      %s25 = sphi 0, %s32
      %s26 = sphi 0, %s24
      %s27 = sphi 0, %s25
      %s28 = sphi 0, %s26
      %s29 = sphi 0, %s27
      %s41 = sphi 0, %s43
      %s44 = sphi 0, %s41
      %s45 = sphi 0, %s44
      %s61 = sphi 0, %s45
      %s69 = sphi 0, %s71
      %s72 = sphi 0, %s69
      %s73 = sphi 0, %s72
      %s89 = sphi 0, %s73
      %s93 = sphi 0, %s93
      %s95 = sphi 0, %s93
      %s96 = sphi 0, %s95
      %s110 = sphi 0, %s96
      %s114 = sphi 0, %s114
      %s116 = sphi 0, %s114
      %s117 = sphi 0, %s116
      %s131 = sphi 0, %s117
      %s135 = sphi 0, %s135
      %s137 = sphi 0, %s135
      %s138 = sphi 0, %s137
      %s152 = sphi 0, %s138
      %s156 = sphi 0, %s156
      %s158 = sphi 0, %s156
      %s159 = sphi 0, %s158
      %s173 = sphi 0, %s159
      %s181 = sphi 0, %s183
      %s184 = sphi 0, %s181
      %s185 = sphi 0, %s184
      %s201 = sphi 0, %s185
    $region4: #{trans_unet_forward.5} parent=1 // loop_header_branch
      %20 = sbr.rel (%p18) target = $region8
    $region5: #{trans_unet_forward.5} parent=1 // loop_body
      %s22 = ssub.s32 %s17, 1
      %s23 = ssub.s32 %s17, 2
      %s30 = sadd.s32 1, %s25
      %p31 = scmp.ge.s32.totalorder %s30, 1
      %s32 = scalar_select %p31, 0, %s30
      %s33 = sadd.s32 1, %s24
      %s34 = scalar_select %p31, %s33, %s24
      %p35 = scmp.ge.s32.totalorder %s34, 2
      %s36 = scalar_select %p35, 0, %s34
      %s37 = ssub.s32 %s24, %s36
      %s38 = ssub.s32 %s25, %s32
      %s39 = sor.u32 %s37, %s38
      %p40 = scmp.eq.s32.totalorder %s39, 0
      %s42 = sadd.s32 %s41, 1
      %s43 = scalar_select %p40, %s41, %s42
      %p46 = pneg %p40
      %p47 = scmp.eq.s32.totalorder %s17, 1
      %p48 = por %p46, %p47
      %p49 = scmp.ne.s32.totalorder %s41, %s44
      %p50 = scmp.eq.s32.totalorder %s17, 0
      %p51 = por %p49, %p50
      %p52 = scmp.ne.s32.totalorder %s41, %s44
      %p53 = scmp.eq.s32.totalorder %s22, 1
      %p54 = por %p52, %p53
      %p55 = scmp.ne.s32.totalorder %s44, %s45
      %p56 = scmp.eq.s32.totalorder %s22, 0
      %p57 = por %p55, %p56
      %p58 = scmp.ne.s32.totalorder %s44, %s45
      %p59 = scmp.eq.s32.totalorder %s23, 1
      %p60 = por %p58, %p59
      %p62 = scmp.ne.s32.totalorder %s45, %s61
      %p63 = scmp.eq.s32.totalorder %s23, 0
      %p64 = por %p62, %p63
      %s65 = ssub.s32 %s24, %s36
      %s66 = ssub.s32 %s25, %s32
      %s67 = sor.u32 %s65, %s66
      %p68 = scmp.eq.s32.totalorder %s67, 0
      %s70 = sadd.s32 %s69, 1
      %s71 = scalar_select %p68, %s69, %s70
      %p74 = pneg %p68
      %p75 = scmp.eq.s32.totalorder %s17, 1
      %p76 = por %p74, %p75
      %p77 = scmp.ne.s32.totalorder %s69, %s72
      %p78 = scmp.eq.s32.totalorder %s17, 0
      %p79 = por %p77, %p78
      %p80 = scmp.ne.s32.totalorder %s69, %s72
      %p81 = scmp.eq.s32.totalorder %s22, 1
      %p82 = por %p80, %p81
      %p83 = scmp.ne.s32.totalorder %s72, %s73
      %p84 = scmp.eq.s32.totalorder %s22, 0
      %p85 = por %p83, %p84
      %p86 = scmp.ne.s32.totalorder %s72, %s73
      %p87 = scmp.eq.s32.totalorder %s23, 1
      %p88 = por %p86, %p87
      %p90 = scmp.ne.s32.totalorder %s73, %s89
      %p91 = scmp.eq.s32.totalorder %s23, 0
      %p92 = por %p90, %p91
      %s94 = sadd.s32 %s93, 1
      %p97 = scmp.eq.s32.totalorder %s17, 1
      %p98 = scmp.ne.s32.totalorder %s93, %s95
      %p99 = scmp.eq.s32.totalorder %s17, 0
      %p100 = por %p98, %p99
      %p101 = scmp.ne.s32.totalorder %s93, %s95
      %p102 = scmp.eq.s32.totalorder %s22, 1
      %p103 = por %p101, %p102
      %p104 = scmp.ne.s32.totalorder %s95, %s96
      %p105 = scmp.eq.s32.totalorder %s22, 0
      %p106 = por %p104, %p105
      %p107 = scmp.ne.s32.totalorder %s95, %s96
      %p108 = scmp.eq.s32.totalorder %s23, 1
      %p109 = por %p107, %p108
      %p111 = scmp.ne.s32.totalorder %s96, %s110
      %p112 = scmp.eq.s32.totalorder %s23, 0
      %p113 = por %p111, %p112
      %s115 = sadd.s32 %s114, 1
      %p118 = scmp.eq.s32.totalorder %s17, 1
      %p119 = scmp.ne.s32.totalorder %s114, %s116
      %p120 = scmp.eq.s32.totalorder %s17, 0
      %p121 = por %p119, %p120
      %p122 = scmp.ne.s32.totalorder %s114, %s116
      %p123 = scmp.eq.s32.totalorder %s22, 1
      %p124 = por %p122, %p123
      %p125 = scmp.ne.s32.totalorder %s116, %s117
      %p126 = scmp.eq.s32.totalorder %s22, 0
      %p127 = por %p125, %p126
      %p128 = scmp.ne.s32.totalorder %s116, %s117
      %p129 = scmp.eq.s32.totalorder %s23, 1
      %p130 = por %p128, %p129
      %p132 = scmp.ne.s32.totalorder %s117, %s131
      %p133 = scmp.eq.s32.totalorder %s23, 0
      %p134 = por %p132, %p133
      %s136 = sadd.s32 %s135, 1
      %p139 = scmp.eq.s32.totalorder %s17, 1
      %p140 = scmp.ne.s32.totalorder %s135, %s137
      %p141 = scmp.eq.s32.totalorder %s17, 0
      %p142 = por %p140, %p141
      %p143 = scmp.ne.s32.totalorder %s135, %s137
      %p144 = scmp.eq.s32.totalorder %s22, 1
      %p145 = por %p143, %p144
      %p146 = scmp.ne.s32.totalorder %s137, %s138
      %p147 = scmp.eq.s32.totalorder %s22, 0
      %p148 = por %p146, %p147
      %p149 = scmp.ne.s32.totalorder %s137, %s138
      %p150 = scmp.eq.s32.totalorder %s23, 1
      %p151 = por %p149, %p150
      %p153 = scmp.ne.s32.totalorder %s138, %s152
      %p154 = scmp.eq.s32.totalorder %s23, 0
      %p155 = por %p153, %p154
      %s157 = sadd.s32 %s156, 1
      %p160 = scmp.eq.s32.totalorder %s17, 1
      %p161 = scmp.ne.s32.totalorder %s156, %s158
      %p162 = scmp.eq.s32.totalorder %s17, 0
      %p163 = por %p161, %p162
      %p164 = scmp.ne.s32.totalorder %s156, %s158
      %p165 = scmp.eq.s32.totalorder %s22, 1
      %p166 = por %p164, %p165
      %p167 = scmp.ne.s32.totalorder %s158, %s159
      %p168 = scmp.eq.s32.totalorder %s22, 0
      %p169 = por %p167, %p168
      %p170 = scmp.ne.s32.totalorder %s158, %s159
      %p171 = scmp.eq.s32.totalorder %s23, 1
      %p172 = por %p170, %p171
      %p174 = scmp.ne.s32.totalorder %s159, %s173
      %p175 = scmp.eq.s32.totalorder %s23, 0
      %p176 = por %p174, %p175
      %s177 = ssub.s32 %s24, %s36
      %s178 = ssub.s32 %s25, %s32
      %s179 = sor.u32 %s177, %s178
      %p180 = scmp.eq.s32.totalorder %s179, 0
      %s182 = sadd.s32 %s181, 1
      %s183 = scalar_select %p180, %s181, %s182
      %p186 = pneg %p180
      %p187 = scmp.eq.s32.totalorder %s17, 1
      %p188 = por %p186, %p187
      %p189 = scmp.ne.s32.totalorder %s181, %s184
      %p190 = scmp.eq.s32.totalorder %s17, 0
      %p191 = por %p189, %p190
      %p192 = scmp.ne.s32.totalorder %s181, %s184
      %p193 = scmp.eq.s32.totalorder %s22, 1
      %p194 = por %p192, %p193
      %p195 = scmp.ne.s32.totalorder %s184, %s185
      %p196 = scmp.eq.s32.totalorder %s22, 0
      %p197 = por %p195, %p196
      %p198 = scmp.ne.s32.totalorder %s184, %s185
      %p199 = scmp.eq.s32.totalorder %s23, 1
      %p200 = por %p198, %p199
      %p202 = scmp.ne.s32.totalorder %s185, %s201
      %p203 = scmp.eq.s32.totalorder %s23, 0
      %p204 = por %p202, %p203
      %p205 = scmp.le.s32.totalorder 1, %s17
      %p206 = scmp.lt.s32.totalorder %s17, 3
      %p207 = pnand %p205, %p206
      %p208 = pneg %p207
      // Predicated region
      $region9: #{trans_unet_forward.5} parent=5 // pred_check
        _
      $region10: #{trans_unet_forward.5} parent=5 // pred_check_branch
        %210 = sbr.rel (%p207) target = $region12
      $region11: #{trans_unet_forward.5} parent=5 // pred_region
        %s211 = ssub.s32 %s17, 1
        // Predicated region
        $region13: #{trans_unet_forward.5} parent=11 // pred_check
          %p212 = pneg %p106
        $region14: #{trans_unet_forward.5} parent=11 // pred_check_branch
          %214 = sbr.rel (%p212) target = $region16
        $region15: #{trans_unet_forward.5} parent=11 // pred_region
          _
        $region16: #{trans_unet_forward.5} parent=11 // pred_fallthru
          _
        // Predicated region
        $region17: #{trans_unet_forward.5} parent=11 // pred_check
          %p215 = pneg %p127
        $region18: #{trans_unet_forward.5} parent=11 // pred_check_branch
          %217 = sbr.rel (%p215) target = $region20
        $region19: #{trans_unet_forward.5} parent=11 // pred_region
          _
        $region20: #{trans_unet_forward.5} parent=11 // pred_fallthru
          _
        // Predicated region
        $region21: #{trans_unet_forward.5} parent=11 // pred_check
          %p218 = pneg %p148
        $region22: #{trans_unet_forward.5} parent=11 // pred_check_branch
          %220 = sbr.rel (%p218) target = $region24
        $region23: #{trans_unet_forward.5} parent=11 // pred_region
          _
        $region24: #{trans_unet_forward.5} parent=11 // pred_fallthru
          _
        // Predicated region
        $region25: #{trans_unet_forward.5} parent=11 // pred_check
          %p221 = pneg %p169
        $region26: #{trans_unet_forward.5} parent=11 // pred_check_branch
          %223 = sbr.rel (%p221) target = $region28
        $region27: #{trans_unet_forward.5} parent=11 // pred_region
          _
        $region28: #{trans_unet_forward.5} parent=11 // pred_fallthru
          _
      $region12: #{trans_unet_forward.5} parent=5 // pred_fallthru
        _
      %p224 = scmp.lt.s32.totalorder %s17, 2
      // Predicated region
      $region29: #{trans_unet_forward.5} parent=5 // pred_check
        %p225 = pneg %p224
      $region30: #{trans_unet_forward.5} parent=5 // pred_check_branch
        %227 = sbr.rel (%p225) target = $region32
      $region31: #{trans_unet_forward.5} parent=5 // pred_region
        // Predicated region
        $region33: #{trans_unet_forward.5} parent=31 // pred_check
          %p228 = pneg %p51
        $region34: #{trans_unet_forward.5} parent=31 // pred_check_branch
          %230 = sbr.rel (%p228) target = $region36
        $region35: #{trans_unet_forward.5} parent=31 // pred_region
          %p231 = scmp.lt.s32.totalorder %s24, 1
          %s232 = scalar_select %p231, %s24, 1
          %p233 = scmp.lt.s32.totalorder %s25, 0
          %s234 = scalar_select %p233, %s25, 0
          %s235 = sadd.s32 %s234, %s232
          %s236 = smul.addr %s235, 4
          %s237 = scalar_lea.vmem %s0, %s236
        $region36: #{trans_unet_forward.5} parent=31 // pred_fallthru
          _
        // Predicated region
        $region37: #{trans_unet_forward.5} parent=31 // pred_check
          %p238 = pneg %p79
        $region38: #{trans_unet_forward.5} parent=31 // pred_check_branch
          %240 = sbr.rel (%p238) target = $region40
        $region39: #{trans_unet_forward.5} parent=31 // pred_region
          %s241 = smul.u32 2, %s25
          %p242 = scmp.lt.s32.totalorder %s24, 1
          %s243 = scalar_select %p242, %s24, 1
          %p244 = scmp.lt.s32.totalorder %s241, 1
          %s245 = scalar_select %p244, %s241, 1
          %s246 = smul.addr %s243, 8
          %s247 = sadd.s32 %s245, %s246
          %s248 = smul.addr %s247, 8
          %s249 = scalar_lea.vmem %s1, %s248
          %s250 = smul.u32 2, %s25
        $region40: #{trans_unet_forward.5} parent=31 // pred_fallthru
          _
      $region32: #{trans_unet_forward.5} parent=5 // pred_fallthru
        _
      %p251 = scmp.le.s32.totalorder 1, %s17
      %p252 = scmp.lt.s32.totalorder %s17, 3
      %p253 = pnand %p251, %p252
      %p254 = pneg %p253
      // Predicated region
      $region41: #{trans_unet_forward.5} parent=5 // pred_check
        _
      $region42: #{trans_unet_forward.5} parent=5 // pred_check_branch
        %256 = sbr.rel (%p253) target = $region44
      $region43: #{trans_unet_forward.5} parent=5 // pred_region
        %s257 = ssub.s32 %s17, 1
        %p258 = scmp.lt.s32.totalorder %s26, 1
        %s259 = scalar_select %p258, %s26, 1
        %p260 = scmp.lt.s32.totalorder %s27, 0
        %s261 = scalar_select %p260, %s27, 0
        %s262 = sadd.s32 %s261, %s259
        %s263 = smul.addr %s262, 4
        %s264 = scalar_lea.vmem %s0, %s263
        %p265 = pneg %p57
        %p266 = pneg %p54
        %s267 = smul.u32 2, %s27
        %p268 = scmp.lt.s32.totalorder %s26, 1
        %s269 = scalar_select %p268, %s26, 1
        %p270 = scmp.lt.s32.totalorder %s267, 1
        %s271 = scalar_select %p270, %s267, 1
        %s272 = smul.addr %s269, 8
        %s273 = sadd.s32 %s271, %s272
        %s274 = smul.addr %s273, 8
        %s275 = scalar_lea.vmem %s1, %s274
        %p276 = pneg %p85
        %p277 = pneg %p82
        %p278 = pneg %p106
        %p279 = pneg %p103
        %p280 = pneg %p127
        %p281 = pneg %p124
        %p282 = pneg %p148
        %p283 = pneg %p145
        %p284 = pneg %p169
        %p285 = pneg %p166
        %p286 = pneg %p197
        %p287 = pneg %p194
        %s288 = sand.u32 %s184, 1
        %s289 = scalar_lea.sflag [#allocation5], %s288
        %s290 = sand.u32 %s184, 1
        %s291 = smul.addr %s290, 16
        %s292 = scalar_lea.vmem [#allocation4], %s291
        %p293 = scmp.lt.s32.totalorder %s26, 1
        %s294 = scalar_select %p293, %s26, 1
        %p295 = scmp.lt.s32.totalorder %s27, 0
        %s296 = scalar_select %p295, %s27, 0
        %s297 = sadd.s32 %s296, %s294
        %s298 = smul.addr %s297, 4
        %s299 = scalar_lea.vmem %s0, %s298
        %s300 = smul.u32 2, %s27
        %p301 = scmp.lt.s32.totalorder %s26, 1
        %s302 = scalar_select %p301, %s26, 1
        %p303 = scmp.lt.s32.totalorder %s300, 1
        %s304 = scalar_select %p303, %s300, 1
        %s305 = smul.addr %s302, 8
        %s306 = sadd.s32 %s304, %s305
        %s307 = smul.addr %s306, 8
        %s308 = scalar_lea.vmem %s1, %s307
        %s309 = smul.u32 2, %s27
        %s310 = smul.u32 2, %s27
        %v311 = vld [vmem:[%s299] sm:$0xf]
        %v312 = vld [vmem:[%s308] sm:$0xff]
        %v313 = vld [vmem:[%s308 + $0x8] sm:$0xff]
        %v314 = vld [vmem:[%s308 + $0x10] sm:$0xff]
        %v315 = vld [vmem:[%s308 + $0x18] sm:$0xff]
        %v316 = vld [vmem:[%s308 + $0x20] sm:$0xff]
        %v317 = vld [vmem:[%s308 + $0x28] sm:$0xff]
        %v318 = vld [vmem:[%s308 + $0x30] sm:$0xff]
        %v319 = vld [vmem:[%s308 + $0x38] sm:$0xff]
        %vm320 = vcmask 130048
        %v321 = vsel %vm320, %v312, 0.0
        %v322 = vsel %vm320, %v314, 0.0
        %v323 = vadd.f32 %v321, %v322
        %v324 = vsel %vm320, %v316, 0.0
        %v325 = vadd.f32 %v323, %v324
        %v326 = vsel %vm320, %v318, 0.0
        %v327 = vadd.f32 %v325, %v326
        %v328 = vsel %vm320, %v313, 0.0
        %v329 = vsel %vm320, %v315, 0.0
        %v330 = vadd.f32 %v328, %v329
        %v331 = vsel %vm320, %v317, 0.0
        %v332 = vadd.f32 %v330, %v331
        %v333 = vsel %vm320, %v319, 0.0
        %v334 = vadd.f32 %v332, %v333
        %v335 = vrcp.pop 4.0
        %v336 = vmul.f32 4.0, %v335
        %v337 = vsub.f32 1.0, %v336
        %v338 = vmul.f32 %v335, %v337
        %v339 = vadd.f32 %v335, %v338
        %vm340 = vweird.f32 %v335
        %v341 = vsel %vm340, %v335, %v339
        %v342 = vmul.f32 %v327, %v341
        %v343 = vmul.f32 %v334, %v341
        %v344 = vld [vmem:[%s2] sm:$0xff]
        %v345 = vld [vmem:[%s2 + $0x8] sm:$0xff]
        %vm346 = vcmask 31744
        %v348 = vsel %vm346, %v344, 0
        %v351 = vsel %vm346, %v345, 0
        %vm353 = vcmask 1043456
        %v355 = vsel %vm353, %v311, 0
        %357 = vmatpush.msra.mxu0 0.0
        %358 = vmatpush.msra.mxu0 0.0
        %359 = vmatpush.msra.mxu0 0.0
        %360 = vmatpush.msra.mxu0 0.0
        %361 = vmatpush.msra.mxu0 0.0
        %362 = vmatpush.msra.mxu0 0.0
        %363 = vmatpush.msra.mxu0 0.0
        %364 = vmatpush.msra.mxu0 0.0
        %365 = vmatpush.msra.mxu0 0.0
        %366 = vmatpush.msra.mxu0 0.0
        %367 = vmatpush.msra.mxu0 0.0
        %368 = vmatpush.msra.mxu0 0.0
        %369 = vmatpush.msra.mxu0 0.0
        %370 = vmatpush.msra.mxu0 0.0
        %371 = vmatpush.msra.mxu0 0.0
        %372 = vmatpush.msra.mxu0 %v355
        %373 = vmatmul.f32.gmra.mxu0 %v348
        %v374 = vpop.f32.mrf.mxu0
        %v375 = vadd.f32 0.0, %v374
        %376 = vmatmul.f32.gmra.mxu0 %v351
        %v377 = vpop.f32.mrf.mxu0
        %v378 = vadd.f32 0.0, %v377
        %379 = vdwg.mxu0
        %v380 = vld [vmem:[%s3] sm:$0xf]
        %v382 = vsel %vm346, %v375, 0
        %v385 = vsel %vm346, %v378, 0
        %v388 = vsel %vm353, %v380, 0
        %390 = vmatpush.msra.mxu0 0.0
        %391 = vmatpush.msra.mxu0 0.0
        %392 = vmatpush.msra.mxu0 0.0
        %393 = vmatpush.msra.mxu0 0.0
        %394 = vmatpush.msra.mxu0 0.0
        %395 = vmatpush.msra.mxu0 0.0
        %396 = vmatpush.msra.mxu0 0.0
        %397 = vmatpush.msra.mxu0 0.0
        %398 = vmatpush.msra.mxu0 0.0
        %399 = vmatpush.msra.mxu0 0.0
        %400 = vmatpush.msra.mxu0 0.0
        %401 = vmatpush.msra.mxu0 0.0
        %402 = vmatpush.msra.mxu0 0.0
        %403 = vmatpush.msra.mxu0 0.0
        %404 = vmatpush.msra.mxu0 0.0
        %405 = vmatpush.msra.mxu0 %v388
        %406 = vmatmul.f32.gmra.mxu0 %v382
        %v407 = vpop.f32.mrf.mxu0
        %v408 = vadd.f32 %v342, %v407
        %409 = vmatmul.f32.gmra.mxu0 %v385
        %v410 = vpop.f32.mrf.mxu0
        %v411 = vadd.f32 %v343, %v410
        %412 = vdwg.mxu0
        %s413 = sld [smem:[#allocation2]]
        %v414 = vstv %s413
        %v415 = vmul.f32 %v408, %v414
        %v416 = vmul.f32 %v411, %v414
        %s417 = sld [smem:[#allocation3]]
        %v418 = vstv %s417
        %v419 = vadd.f32 %v415, %v418
        %v420 = vadd.f32 %v416, %v418
        %421 = vst.msk [vmem:[%s292] sm:$0xff] %vm320, %v419
        %422 = vst.msk [vmem:[%s292 + $0x8] sm:$0xff] %vm320, %v420
        %s423 = sand.u32 %s184, 1
        %s424 = scalar_lea.sflag [#allocation5], %s423
        %s425 = sand.u32 %s184, 1
        %s426 = smul.addr %s425, 16
        %s427 = scalar_lea.vmem [#allocation4], %s426
        // Predicated region
        $region45: #{trans_unet_forward.5} parent=43 // pred_check
          %p428 = pneg %p194
        $region46: #{trans_unet_forward.5} parent=43 // pred_check_branch
          %430 = sbr.rel (%p428) target = $region48
        $region47: #{trans_unet_forward.5} parent=43 // pred_region
          %s431 = smul.u32 2, %s27
          %433 = vsyncadd %s424, 0
          %s434 = smul.addr %s26, 2
          %s435 = sadd.s32 %s431, %s434
          %s436 = smul.addr %s435, 8
          %s437 = scalar_lea.hbm %s6, %s436
          %s438 = sshll.u32 %s427, 4
          %s439 = int_to_ptr.vmem [resolvable:$true] %s438
          %s440 = sshll.u32 %s437, 4
          %s441 = int_to_ptr.hbm [resolvable:$true] %s440
          %446 = dma.vmem_to_hbm [thread:$0]  %s439, 256, %s441, %s424, 128, 128, 8
        $region48: #{trans_unet_forward.5} parent=43 // pred_fallthru
          _
      $region44: #{trans_unet_forward.5} parent=5 // pred_fallthru
        _
      %p447 = scmp.le.s32.totalorder 2, %s17
      // Predicated region
      $region49: #{trans_unet_forward.5} parent=5 // pred_check
        %p448 = pneg %p447
      $region50: #{trans_unet_forward.5} parent=5 // pred_check_branch
        %450 = sbr.rel (%p448) target = $region52
      $region51: #{trans_unet_forward.5} parent=5 // pred_region
        %s451 = ssub.s32 %s17, 2
        // Predicated region
        $region53: #{trans_unet_forward.5} parent=51 // pred_check
          %p452 = pneg %p200
        $region54: #{trans_unet_forward.5} parent=51 // pred_check_branch
          %454 = sbr.rel (%p452) target = $region56
        $region55: #{trans_unet_forward.5} parent=51 // pred_region
          %s455 = sand.u32 %s185, 1
          %s456 = scalar_lea.sflag [#allocation5], %s455
          %s457 = sand.u32 %s185, 1
          %s458 = smul.addr %s457, 16
          %s459 = scalar_lea.vmem [#allocation4], %s458
          %461 = dma.done %s456, 256
        $region56: #{trans_unet_forward.5} parent=51 // pred_fallthru
          _
      $region52: #{trans_unet_forward.5} parent=5 // pred_fallthru
        _
    $region6: #{trans_unet_forward.5} parent=1 // loop_footer
      %s21 = sadd.s32 1, %s17
    $region7: #{trans_unet_forward.5} parent=1 // loop_footer_branch
      %16 = sbr.rel target = $region3
    $region8: #{trans_unet_forward.5} parent=1 // loop_exit
      _
    %462 = vsyncpa [#allocation5], 1
    %s463 = scalar_lea.sflag [#allocation5], 1
    %464 = vsyncpa %s463, 1

// kernel: trans_unet_forward.4
$region0: #{trans_unet_forward.4}
  #allocation0 [shape = 'u32[]', space=smem, size = 0x4, offset = 0x4, fixed_abs, tag = 'smem constant byte address 0x4 - core index']
  #allocation1 [shape = 'u32[72,128]{1,0:T(1,128)}', space=vmem, size = 0x9000, scoped, tag = 'internal scratch']
  #allocation2 [shape = 'bf16[16,384]{1,0:T(8,128)(2,1)}', space=vmem, size = 0x3000, scoped, tag = 'scratch operand']
  #allocation3 [shape = 'f32[1,1]{1,0:T(1,128)S(6)}', space=smem, size = 0x200, scoped, tag = 'scoped memory for trans_unet_forward.4']
  %s0 = inlined_call_operand.vmem [shape: f32[2,16,128], index: 0, kind: input, shape index: {}]
  %s1 = inlined_call_operand.vmem [shape: f32[1,128], index: 1, kind: input, shape index: {}]
  %s2 = inlined_call_operand.vmem [shape: f32[1,128], index: 2, kind: input, shape index: {}]
  %s3 = inlined_call_operand.vmem [shape: bf16[128,384], index: 3, kind: input, shape index: {}]
  %s4 = inlined_call_operand.vmem [shape: bf16[128,128], index: 4, kind: input, shape index: {}]
  %s5 = inlined_call_operand.vmem [shape: f32[1,128], index: 5, kind: input, shape index: {}]
  %s6 = inlined_call_operand.vmem [shape: f32[1,128], index: 6, kind: input, shape index: {}]
  %s7 = inlined_call_operand.vmem [shape: bf16[128,256], index: 7, kind: input, shape index: {}]
  %s8 = inlined_call_operand.vmem [shape: f32[1,256], index: 8, kind: input, shape index: {}]
  %s9 = inlined_call_operand.vmem [shape: bf16[256,128], index: 9, kind: input, shape index: {}]
  %s10 = inlined_call_operand.vmem [shape: f32[1,128], index: 10, kind: input, shape index: {}]
  %s11 = inlined_call_operand.vmem [shape: f32[1,128], index: 11, kind: input, shape index: {}]
  %s12 = inlined_call_operand.<no memory space> [shape: f32[1,1], index: 12, kind: input, shape index: {}]
  %s13 = inlined_call_operand.vmem [shape: f32[2,16,1], index: 13, kind: output, shape index: {}]
  %s14 = sld [smem:[#allocation0]]
  $region89: #{trans_unet_forward.4} parent=0
    _
  %s16 = ssub.s32 1, %s14
  %s17 = scalar_select 0, %s16, %s14
  %18 = sst [smem:[#allocation3]] %s12
  loop: start=0, step=1, limit=4
  $region2: #{trans_unet_forward.4} parent=0 // loop_pre_header
    _
  $region3: #{trans_unet_forward.4} parent=0 // loop_header
    %s20 = sphi 0, %s24
    %p21 = scmp.ge.s32.totalorder %s20, 4
    %s27 = sphi 0, %s39
    %s28 = sphi 0, %s35
    %s29 = sphi 0, %s27
    %s30 = sphi 0, %s28
    %s31 = sphi 0, %s29
    %s32 = sphi 0, %s30
    %s42 = sphi 0, %s44
    %s45 = sphi 0, %s42
    %s46 = sphi 0, %s45
    %s62 = sphi 0, %s46
    %s66 = sphi 0, %s66
    %s68 = sphi 0, %s66
    %s69 = sphi 0, %s68
    %s83 = sphi 0, %s69
    %s87 = sphi 0, %s87
    %s89 = sphi 0, %s87
    %s90 = sphi 0, %s89
    %s104 = sphi 0, %s90
    %s108 = sphi 0, %s108
    %s110 = sphi 0, %s108
    %s111 = sphi 0, %s110
    %s125 = sphi 0, %s111
    %s129 = sphi 0, %s129
    %s131 = sphi 0, %s129
    %s132 = sphi 0, %s131
    %s146 = sphi 0, %s132
    %s150 = sphi 0, %s150
    %s152 = sphi 0, %s150
    %s153 = sphi 0, %s152
    %s167 = sphi 0, %s153
    %s171 = sphi 0, %s171
    %s173 = sphi 0, %s171
    %s174 = sphi 0, %s173
    %s188 = sphi 0, %s174
    %s192 = sphi 0, %s192
    %s194 = sphi 0, %s192
    %s195 = sphi 0, %s194
    %s209 = sphi 0, %s195
    %s213 = sphi 0, %s213
    %s215 = sphi 0, %s213
    %s216 = sphi 0, %s215
    %s230 = sphi 0, %s216
    %s234 = sphi 0, %s234
    %s236 = sphi 0, %s234
    %s237 = sphi 0, %s236
    %s251 = sphi 0, %s237
    %s255 = sphi 0, %s255
    %s257 = sphi 0, %s255
    %s258 = sphi 0, %s257
    %s272 = sphi 0, %s258
    %s276 = sphi 0, %s276
    %s278 = sphi 0, %s276
    %s279 = sphi 0, %s278
    %s293 = sphi 0, %s279
    %s297 = sphi 0, %s297
    %s299 = sphi 0, %s297
    %s300 = sphi 0, %s299
    %s314 = sphi 0, %s300
    %s322 = sphi 0, %s324
    %s325 = sphi 0, %s322
    %s326 = sphi 0, %s325
    %s342 = sphi 0, %s326
  $region4: #{trans_unet_forward.4} parent=0 // loop_header_branch
    %23 = sbr.rel (%p21) target = $region8
  $region5: #{trans_unet_forward.4} parent=0 // loop_body
    %s25 = ssub.s32 %s20, 1
    %s26 = ssub.s32 %s20, 2
    %s33 = sadd.s32 1, %s28
    %p34 = scmp.ge.s32.totalorder %s33, 1
    %s35 = scalar_select %p34, 0, %s33
    %s36 = sadd.s32 1, %s27
    %s37 = scalar_select %p34, %s36, %s27
    %p38 = scmp.ge.s32.totalorder %s37, 2
    %s39 = scalar_select %p38, 0, %s37
    %s40 = ssub.s32 %s27, %s39
    %p41 = scmp.eq.s32.totalorder %s40, 0
    %s43 = sadd.s32 %s42, 1
    %s44 = scalar_select %p41, %s42, %s43
    %p47 = pneg %p41
    %p48 = scmp.eq.s32.totalorder %s20, 1
    %p49 = por %p47, %p48
    %p50 = scmp.ne.s32.totalorder %s42, %s45
    %p51 = scmp.eq.s32.totalorder %s20, 0
    %p52 = por %p50, %p51
    %p53 = scmp.ne.s32.totalorder %s42, %s45
    %p54 = scmp.eq.s32.totalorder %s25, 1
    %p55 = por %p53, %p54
    %p56 = scmp.ne.s32.totalorder %s45, %s46
    %p57 = scmp.eq.s32.totalorder %s25, 0
    %p58 = por %p56, %p57
    %p59 = scmp.ne.s32.totalorder %s45, %s46
    %p60 = scmp.eq.s32.totalorder %s26, 1
    %p61 = por %p59, %p60
    %p63 = scmp.ne.s32.totalorder %s46, %s62
    %p64 = scmp.eq.s32.totalorder %s26, 0
    %p65 = por %p63, %p64
    %s67 = sadd.s32 %s66, 1
    %p70 = scmp.eq.s32.totalorder %s20, 1
    %p71 = scmp.ne.s32.totalorder %s66, %s68
    %p72 = scmp.eq.s32.totalorder %s20, 0
    %p73 = por %p71, %p72
    %p74 = scmp.ne.s32.totalorder %s66, %s68
    %p75 = scmp.eq.s32.totalorder %s25, 1
    %p76 = por %p74, %p75
    %p77 = scmp.ne.s32.totalorder %s68, %s69
    %p78 = scmp.eq.s32.totalorder %s25, 0
    %p79 = por %p77, %p78
    %p80 = scmp.ne.s32.totalorder %s68, %s69
    %p81 = scmp.eq.s32.totalorder %s26, 1
    %p82 = por %p80, %p81
    %p84 = scmp.ne.s32.totalorder %s69, %s83
    %p85 = scmp.eq.s32.totalorder %s26, 0
    %p86 = por %p84, %p85
    %s88 = sadd.s32 %s87, 1
    %p91 = scmp.eq.s32.totalorder %s20, 1
    %p92 = scmp.ne.s32.totalorder %s87, %s89
    %p93 = scmp.eq.s32.totalorder %s20, 0
    %p94 = por %p92, %p93
    %p95 = scmp.ne.s32.totalorder %s87, %s89
    %p96 = scmp.eq.s32.totalorder %s25, 1
    %p97 = por %p95, %p96
    %p98 = scmp.ne.s32.totalorder %s89, %s90
    %p99 = scmp.eq.s32.totalorder %s25, 0
    %p100 = por %p98, %p99
    %p101 = scmp.ne.s32.totalorder %s89, %s90
    %p102 = scmp.eq.s32.totalorder %s26, 1
    %p103 = por %p101, %p102
    %p105 = scmp.ne.s32.totalorder %s90, %s104
    %p106 = scmp.eq.s32.totalorder %s26, 0
    %p107 = por %p105, %p106
    %s109 = sadd.s32 %s108, 1
    %p112 = scmp.eq.s32.totalorder %s20, 1
    %p113 = scmp.ne.s32.totalorder %s108, %s110
    %p114 = scmp.eq.s32.totalorder %s20, 0
    %p115 = por %p113, %p114
    %p116 = scmp.ne.s32.totalorder %s108, %s110
    %p117 = scmp.eq.s32.totalorder %s25, 1
    %p118 = por %p116, %p117
    %p119 = scmp.ne.s32.totalorder %s110, %s111
    %p120 = scmp.eq.s32.totalorder %s25, 0
    %p121 = por %p119, %p120
    %p122 = scmp.ne.s32.totalorder %s110, %s111
    %p123 = scmp.eq.s32.totalorder %s26, 1
    %p124 = por %p122, %p123
    %p126 = scmp.ne.s32.totalorder %s111, %s125
    %p127 = scmp.eq.s32.totalorder %s26, 0
    %p128 = por %p126, %p127
    %s130 = sadd.s32 %s129, 1
    %p133 = scmp.eq.s32.totalorder %s20, 1
    %p134 = scmp.ne.s32.totalorder %s129, %s131
    %p135 = scmp.eq.s32.totalorder %s20, 0
    %p136 = por %p134, %p135
    %p137 = scmp.ne.s32.totalorder %s129, %s131
    %p138 = scmp.eq.s32.totalorder %s25, 1
    %p139 = por %p137, %p138
    %p140 = scmp.ne.s32.totalorder %s131, %s132
    %p141 = scmp.eq.s32.totalorder %s25, 0
    %p142 = por %p140, %p141
    %p143 = scmp.ne.s32.totalorder %s131, %s132
    %p144 = scmp.eq.s32.totalorder %s26, 1
    %p145 = por %p143, %p144
    %p147 = scmp.ne.s32.totalorder %s132, %s146
    %p148 = scmp.eq.s32.totalorder %s26, 0
    %p149 = por %p147, %p148
    %s151 = sadd.s32 %s150, 1
    %p154 = scmp.eq.s32.totalorder %s20, 1
    %p155 = scmp.ne.s32.totalorder %s150, %s152
    %p156 = scmp.eq.s32.totalorder %s20, 0
    %p157 = por %p155, %p156
    %p158 = scmp.ne.s32.totalorder %s150, %s152
    %p159 = scmp.eq.s32.totalorder %s25, 1
    %p160 = por %p158, %p159
    %p161 = scmp.ne.s32.totalorder %s152, %s153
    %p162 = scmp.eq.s32.totalorder %s25, 0
    %p163 = por %p161, %p162
    %p164 = scmp.ne.s32.totalorder %s152, %s153
    %p165 = scmp.eq.s32.totalorder %s26, 1
    %p166 = por %p164, %p165
    %p168 = scmp.ne.s32.totalorder %s153, %s167
    %p169 = scmp.eq.s32.totalorder %s26, 0
    %p170 = por %p168, %p169
    %s172 = sadd.s32 %s171, 1
    %p175 = scmp.eq.s32.totalorder %s20, 1
    %p176 = scmp.ne.s32.totalorder %s171, %s173
    %p177 = scmp.eq.s32.totalorder %s20, 0
    %p178 = por %p176, %p177
    %p179 = scmp.ne.s32.totalorder %s171, %s173
    %p180 = scmp.eq.s32.totalorder %s25, 1
    %p181 = por %p179, %p180
    %p182 = scmp.ne.s32.totalorder %s173, %s174
    %p183 = scmp.eq.s32.totalorder %s25, 0
    %p184 = por %p182, %p183
    %p185 = scmp.ne.s32.totalorder %s173, %s174
    %p186 = scmp.eq.s32.totalorder %s26, 1
    %p187 = por %p185, %p186
    %p189 = scmp.ne.s32.totalorder %s174, %s188
    %p190 = scmp.eq.s32.totalorder %s26, 0
    %p191 = por %p189, %p190
    %s193 = sadd.s32 %s192, 1
    %p196 = scmp.eq.s32.totalorder %s20, 1
    %p197 = scmp.ne.s32.totalorder %s192, %s194
    %p198 = scmp.eq.s32.totalorder %s20, 0
    %p199 = por %p197, %p198
    %p200 = scmp.ne.s32.totalorder %s192, %s194
    %p201 = scmp.eq.s32.totalorder %s25, 1
    %p202 = por %p200, %p201
    %p203 = scmp.ne.s32.totalorder %s194, %s195
    %p204 = scmp.eq.s32.totalorder %s25, 0
    %p205 = por %p203, %p204
    %p206 = scmp.ne.s32.totalorder %s194, %s195
    %p207 = scmp.eq.s32.totalorder %s26, 1
    %p208 = por %p206, %p207
    %p210 = scmp.ne.s32.totalorder %s195, %s209
    %p211 = scmp.eq.s32.totalorder %s26, 0
    %p212 = por %p210, %p211
    %s214 = sadd.s32 %s213, 1
    %p217 = scmp.eq.s32.totalorder %s20, 1
    %p218 = scmp.ne.s32.totalorder %s213, %s215
    %p219 = scmp.eq.s32.totalorder %s20, 0
    %p220 = por %p218, %p219
    %p221 = scmp.ne.s32.totalorder %s213, %s215
    %p222 = scmp.eq.s32.totalorder %s25, 1
    %p223 = por %p221, %p222
    %p224 = scmp.ne.s32.totalorder %s215, %s216
    %p225 = scmp.eq.s32.totalorder %s25, 0
    %p226 = por %p224, %p225
    %p227 = scmp.ne.s32.totalorder %s215, %s216
    %p228 = scmp.eq.s32.totalorder %s26, 1
    %p229 = por %p227, %p228
    %p231 = scmp.ne.s32.totalorder %s216, %s230
    %p232 = scmp.eq.s32.totalorder %s26, 0
    %p233 = por %p231, %p232
    %s235 = sadd.s32 %s234, 1
    %p238 = scmp.eq.s32.totalorder %s20, 1
    %p239 = scmp.ne.s32.totalorder %s234, %s236
    %p240 = scmp.eq.s32.totalorder %s20, 0
    %p241 = por %p239, %p240
    %p242 = scmp.ne.s32.totalorder %s234, %s236
    %p243 = scmp.eq.s32.totalorder %s25, 1
    %p244 = por %p242, %p243
    %p245 = scmp.ne.s32.totalorder %s236, %s237
    %p246 = scmp.eq.s32.totalorder %s25, 0
    %p247 = por %p245, %p246
    %p248 = scmp.ne.s32.totalorder %s236, %s237
    %p249 = scmp.eq.s32.totalorder %s26, 1
    %p250 = por %p248, %p249
    %p252 = scmp.ne.s32.totalorder %s237, %s251
    %p253 = scmp.eq.s32.totalorder %s26, 0
    %p254 = por %p252, %p253
    %s256 = sadd.s32 %s255, 1
    %p259 = scmp.eq.s32.totalorder %s20, 1
    %p260 = scmp.ne.s32.totalorder %s255, %s257
    %p261 = scmp.eq.s32.totalorder %s20, 0
    %p262 = por %p260, %p261
    %p263 = scmp.ne.s32.totalorder %s255, %s257
    %p264 = scmp.eq.s32.totalorder %s25, 1
    %p265 = por %p263, %p264
    %p266 = scmp.ne.s32.totalorder %s257, %s258
    %p267 = scmp.eq.s32.totalorder %s25, 0
    %p268 = por %p266, %p267
    %p269 = scmp.ne.s32.totalorder %s257, %s258
    %p270 = scmp.eq.s32.totalorder %s26, 1
    %p271 = por %p269, %p270
    %p273 = scmp.ne.s32.totalorder %s258, %s272
    %p274 = scmp.eq.s32.totalorder %s26, 0
    %p275 = por %p273, %p274
    %s277 = sadd.s32 %s276, 1
    %p280 = scmp.eq.s32.totalorder %s20, 1
    %p281 = scmp.ne.s32.totalorder %s276, %s278
    %p282 = scmp.eq.s32.totalorder %s20, 0
    %p283 = por %p281, %p282
    %p284 = scmp.ne.s32.totalorder %s276, %s278
    %p285 = scmp.eq.s32.totalorder %s25, 1
    %p286 = por %p284, %p285
    %p287 = scmp.ne.s32.totalorder %s278, %s279
    %p288 = scmp.eq.s32.totalorder %s25, 0
    %p289 = por %p287, %p288
    %p290 = scmp.ne.s32.totalorder %s278, %s279
    %p291 = scmp.eq.s32.totalorder %s26, 1
    %p292 = por %p290, %p291
    %p294 = scmp.ne.s32.totalorder %s279, %s293
    %p295 = scmp.eq.s32.totalorder %s26, 0
    %p296 = por %p294, %p295
    %s298 = sadd.s32 %s297, 1
    %p301 = scmp.eq.s32.totalorder %s20, 1
    %p302 = scmp.ne.s32.totalorder %s297, %s299
    %p303 = scmp.eq.s32.totalorder %s20, 0
    %p304 = por %p302, %p303
    %p305 = scmp.ne.s32.totalorder %s297, %s299
    %p306 = scmp.eq.s32.totalorder %s25, 1
    %p307 = por %p305, %p306
    %p308 = scmp.ne.s32.totalorder %s299, %s300
    %p309 = scmp.eq.s32.totalorder %s25, 0
    %p310 = por %p308, %p309
    %p311 = scmp.ne.s32.totalorder %s299, %s300
    %p312 = scmp.eq.s32.totalorder %s26, 1
    %p313 = por %p311, %p312
    %p315 = scmp.ne.s32.totalorder %s300, %s314
    %p316 = scmp.eq.s32.totalorder %s26, 0
    %p317 = por %p315, %p316
    %s318 = ssub.s32 %s27, %s39
    %s319 = ssub.s32 %s28, %s35
    %s320 = sor.u32 %s318, %s319
    %p321 = scmp.eq.s32.totalorder %s320, 0
    %s323 = sadd.s32 %s322, 1
    %s324 = scalar_select %p321, %s322, %s323
    %p327 = pneg %p321
    %p328 = scmp.eq.s32.totalorder %s20, 1
    %p329 = por %p327, %p328
    %p330 = scmp.ne.s32.totalorder %s322, %s325
    %p331 = scmp.eq.s32.totalorder %s20, 0
    %p332 = por %p330, %p331
    %p333 = scmp.ne.s32.totalorder %s322, %s325
    %p334 = scmp.eq.s32.totalorder %s25, 1
    %p335 = por %p333, %p334
    %p336 = scmp.ne.s32.totalorder %s325, %s326
    %p337 = scmp.eq.s32.totalorder %s25, 0
    %p338 = por %p336, %p337
    %p339 = scmp.ne.s32.totalorder %s325, %s326
    %p340 = scmp.eq.s32.totalorder %s26, 1
    %p341 = por %p339, %p340
    %p343 = scmp.ne.s32.totalorder %s326, %s342
    %p344 = scmp.eq.s32.totalorder %s26, 0
    %p345 = por %p343, %p344
    %p346 = scmp.le.s32.totalorder 1, %s20
    %p347 = scmp.lt.s32.totalorder %s20, 3
    %p348 = pnand %p346, %p347
    %p349 = pneg %p348
    // Predicated region
    $region9: #{trans_unet_forward.4} parent=5 // pred_check
      _
    $region10: #{trans_unet_forward.4} parent=5 // pred_check_branch
      %351 = sbr.rel (%p348) target = $region12
    $region11: #{trans_unet_forward.4} parent=5 // pred_region
      %s352 = ssub.s32 %s20, 1
      // Predicated region
      $region13: #{trans_unet_forward.4} parent=11 // pred_check
        %p353 = pneg %p79
      $region14: #{trans_unet_forward.4} parent=11 // pred_check_branch
        %355 = sbr.rel (%p353) target = $region16
      $region15: #{trans_unet_forward.4} parent=11 // pred_region
        _
      $region16: #{trans_unet_forward.4} parent=11 // pred_fallthru
        _
      // Predicated region
      $region17: #{trans_unet_forward.4} parent=11 // pred_check
        %p356 = pneg %p100
      $region18: #{trans_unet_forward.4} parent=11 // pred_check_branch
        %358 = sbr.rel (%p356) target = $region20
      $region19: #{trans_unet_forward.4} parent=11 // pred_region
        _
      $region20: #{trans_unet_forward.4} parent=11 // pred_fallthru
        _
      // Predicated region
      $region21: #{trans_unet_forward.4} parent=11 // pred_check
        %p359 = pneg %p121
      $region22: #{trans_unet_forward.4} parent=11 // pred_check_branch
        %361 = sbr.rel (%p359) target = $region24
      $region23: #{trans_unet_forward.4} parent=11 // pred_region
        _
      $region24: #{trans_unet_forward.4} parent=11 // pred_fallthru
        _
      // Predicated region
      $region25: #{trans_unet_forward.4} parent=11 // pred_check
        %p362 = pneg %p142
      $region26: #{trans_unet_forward.4} parent=11 // pred_check_branch
        %364 = sbr.rel (%p362) target = $region28
      $region27: #{trans_unet_forward.4} parent=11 // pred_region
        _
      $region28: #{trans_unet_forward.4} parent=11 // pred_fallthru
        _
      // Predicated region
      $region29: #{trans_unet_forward.4} parent=11 // pred_check
        %p365 = pneg %p163
      $region30: #{trans_unet_forward.4} parent=11 // pred_check_branch
        %367 = sbr.rel (%p365) target = $region32
      $region31: #{trans_unet_forward.4} parent=11 // pred_region
        _
      $region32: #{trans_unet_forward.4} parent=11 // pred_fallthru
        _
      // Predicated region
      $region33: #{trans_unet_forward.4} parent=11 // pred_check
        %p368 = pneg %p184
      $region34: #{trans_unet_forward.4} parent=11 // pred_check_branch
        %370 = sbr.rel (%p368) target = $region36
      $region35: #{trans_unet_forward.4} parent=11 // pred_region
        _
      $region36: #{trans_unet_forward.4} parent=11 // pred_fallthru
        _
      // Predicated region
      $region37: #{trans_unet_forward.4} parent=11 // pred_check
        %p371 = pneg %p205
      $region38: #{trans_unet_forward.4} parent=11 // pred_check_branch
        %373 = sbr.rel (%p371) target = $region40
      $region39: #{trans_unet_forward.4} parent=11 // pred_region
        _
      $region40: #{trans_unet_forward.4} parent=11 // pred_fallthru
        _
      // Predicated region
      $region41: #{trans_unet_forward.4} parent=11 // pred_check
        %p374 = pneg %p226
      $region42: #{trans_unet_forward.4} parent=11 // pred_check_branch
        %376 = sbr.rel (%p374) target = $region44
      $region43: #{trans_unet_forward.4} parent=11 // pred_region
        _
      $region44: #{trans_unet_forward.4} parent=11 // pred_fallthru
        _
      // Predicated region
      $region45: #{trans_unet_forward.4} parent=11 // pred_check
        %p377 = pneg %p247
      $region46: #{trans_unet_forward.4} parent=11 // pred_check_branch
        %379 = sbr.rel (%p377) target = $region48
      $region47: #{trans_unet_forward.4} parent=11 // pred_region
        _
      $region48: #{trans_unet_forward.4} parent=11 // pred_fallthru
        _
      // Predicated region
      $region49: #{trans_unet_forward.4} parent=11 // pred_check
        %p380 = pneg %p268
      $region50: #{trans_unet_forward.4} parent=11 // pred_check_branch
        %382 = sbr.rel (%p380) target = $region52
      $region51: #{trans_unet_forward.4} parent=11 // pred_region
        _
      $region52: #{trans_unet_forward.4} parent=11 // pred_fallthru
        _
      // Predicated region
      $region53: #{trans_unet_forward.4} parent=11 // pred_check
        %p383 = pneg %p289
      $region54: #{trans_unet_forward.4} parent=11 // pred_check_branch
        %385 = sbr.rel (%p383) target = $region56
      $region55: #{trans_unet_forward.4} parent=11 // pred_region
        _
      $region56: #{trans_unet_forward.4} parent=11 // pred_fallthru
        _
      // Predicated region
      $region57: #{trans_unet_forward.4} parent=11 // pred_check
        %p386 = pneg %p310
      $region58: #{trans_unet_forward.4} parent=11 // pred_check_branch
        %388 = sbr.rel (%p386) target = $region60
      $region59: #{trans_unet_forward.4} parent=11 // pred_region
        _
      $region60: #{trans_unet_forward.4} parent=11 // pred_fallthru
        _
    $region12: #{trans_unet_forward.4} parent=5 // pred_fallthru
      _
    %p389 = scmp.lt.s32.totalorder %s20, 2
    // Predicated region
    $region61: #{trans_unet_forward.4} parent=5 // pred_check
      %p390 = pneg %p389
    $region62: #{trans_unet_forward.4} parent=5 // pred_check_branch
      %392 = sbr.rel (%p390) target = $region64
    $region63: #{trans_unet_forward.4} parent=5 // pred_region
      // Predicated region
      $region65: #{trans_unet_forward.4} parent=63 // pred_check
        %p393 = pneg %p52
      $region66: #{trans_unet_forward.4} parent=63 // pred_check_branch
        %395 = sbr.rel (%p393) target = $region68
      $region67: #{trans_unet_forward.4} parent=63 // pred_region
        %p396 = scmp.lt.s32.totalorder %s27, 1
        %s397 = scalar_select %p396, %s27, 1
        %s398 = smul.addr %s397, 2
        %s399 = smul.addr %s398, 8
        %s400 = scalar_lea.vmem %s0, %s399
      $region68: #{trans_unet_forward.4} parent=63 // pred_fallthru
        _
    $region64: #{trans_unet_forward.4} parent=5 // pred_fallthru
      _
    %p401 = scmp.le.s32.totalorder 1, %s20
    %p402 = scmp.lt.s32.totalorder %s20, 3
    %p403 = pnand %p401, %p402
    %p404 = pneg %p403
    // Predicated region
    $region69: #{trans_unet_forward.4} parent=5 // pred_check
      _
    $region70: #{trans_unet_forward.4} parent=5 // pred_check_branch
      %406 = sbr.rel (%p403) target = $region72
    $region71: #{trans_unet_forward.4} parent=5 // pred_region
      %s407 = ssub.s32 %s20, 1
      %p408 = scmp.lt.s32.totalorder %s29, 1
      %s409 = scalar_select %p408, %s29, 1
      %s410 = smul.addr %s409, 2
      %s411 = smul.addr %s410, 8
      %s412 = scalar_lea.vmem %s0, %s411
      %p413 = pneg %p58
      %p414 = pneg %p55
      %p415 = pneg %p79
      %p416 = pneg %p76
      %p417 = pneg %p100
      %p418 = pneg %p97
      %p419 = pneg %p121
      %p420 = pneg %p118
      %p421 = pneg %p142
      %p422 = pneg %p139
      %p423 = pneg %p163
      %p424 = pneg %p160
      %p425 = pneg %p184
      %p426 = pneg %p181
      %p427 = pneg %p205
      %p428 = pneg %p202
      %p429 = pneg %p226
      %p430 = pneg %p223
      %p431 = pneg %p247
      %p432 = pneg %p244
      %p433 = pneg %p268
      %p434 = pneg %p265
      %p435 = pneg %p289
      %p436 = pneg %p286
      %p437 = pneg %p310
      %p438 = pneg %p307
      %p439 = pneg %p338
      %p440 = pneg %p335
      %s441 = smul.u32 2, %s30
      %p442 = scmp.lt.s32.totalorder %s29, 1
      %s443 = scalar_select %p442, %s29, 1
      %p444 = scmp.lt.s32.totalorder %s441, 1
      %s445 = scalar_select %p444, %s441, 1
      %s446 = smul.addr %s443, 2
      %s447 = sadd.s32 %s445, %s446
      %s448 = smul.addr %s447, 8
      %s449 = scalar_lea.vmem %s13, %s448
      %p450 = scmp.lt.s32.totalorder %s29, 1
      %s451 = scalar_select %p450, %s29, 1
      %s452 = smul.addr %s451, 2
      %s453 = smul.addr %s452, 8
      %s454 = scalar_lea.vmem %s0, %s453
      %s455 = smul.u32 2, %s30
      %p456 = scmp.lt.s32.totalorder %s29, 1
      %s457 = scalar_select %p456, %s29, 1
      %p458 = scmp.lt.s32.totalorder %s455, 1
      %s459 = scalar_select %p458, %s455, 1
      %s460 = smul.addr %s457, 2
      %s461 = sadd.s32 %s459, %s460
      %s462 = smul.addr %s461, 8
      %s463 = scalar_lea.vmem %s13, %s462
      %s464 = smul.u32 2, %s30
      %p466 = scmp.eq.s32.totalorder %s30, 0
      // Predicated region
      $region73: #{trans_unet_forward.4} parent=71 // pred_check
        %p467 = pneg %p466
      $region74: #{trans_unet_forward.4} parent=71 // pred_check_branch
        %469 = sbr.rel (%p467) target = $region76
      $region75: #{trans_unet_forward.4} parent=71 // pred_region
        %v470 = vld [vmem:[%s454] sm:$0xff]
        %v471 = vld [vmem:[%s454 + $0x8] sm:$0xff]
        %v472 = vld [vmem:[%s1] sm:$0x1]
        %v473 = vld [vmem:[%s2] sm:$0x1]
        %474 = vadd.xlane.f32.xlu0 %v470
        %v475 = vpop.xlane.xlu0 %474
        %476 = vadd.xlane.f32.xlu0 %v471
        %v477 = vpop.xlane.xlu0 %476
        %v478 = vrcp.pop 128.0
        %v479 = vmul.f32 128.0, %v478
        %v480 = vsub.f32 1.0, %v479
        %v481 = vmul.f32 %v478, %v480
        %v482 = vadd.f32 %v478, %v481
        %vm483 = vweird.f32 %v478
        %v484 = vsel %vm483, %v478, %v482
        %v485 = vmul.f32 %v475, %v484
        %v486 = vmul.f32 %v477, %v484
        %v487 = vsub.f32 %v470, %v485
        %v488 = vsub.f32 %v471, %v486
        %v489 = vmul.f32 %v487, %v487
        %v490 = vmul.f32 %v488, %v488
        %491 = vadd.xlane.f32.xlu0 %v489
        %v492 = vpop.xlane.xlu0 %491
        %493 = vadd.xlane.f32.xlu0 %v490
        %v494 = vpop.xlane.xlu0 %493
        %v495 = vmul.f32 %v492, %v484
        %v496 = vmul.f32 %v494, %v484
        %v497 = vadd.f32 %v495, 1e-05
        %v498 = vadd.f32 %v496, 1e-05
        %v499 = vrsqrt.pop %v497
        %v500 = vmul.f32 %v499, %v497
        %v501 = vmul.f32 %v500, %v499
        %v502 = vmul.f32 0.5, %v501
        %v503 = vsub.f32 1.5, %v502
        %v504 = vmul.f32 %v499, %v503
        %vm505 = vweird.f32 %v497
        %vm506 = vweird.f32 %v499
        %vm507 = vmor %vm505, %vm506
        %v508 = vsel %vm507, %v499, %v504
        %v509 = vrsqrt.pop %v498
        %v510 = vmul.f32 %v509, %v498
        %v511 = vmul.f32 %v510, %v509
        %v512 = vmul.f32 0.5, %v511
        %v513 = vsub.f32 1.5, %v512
        %v514 = vmul.f32 %v509, %v513
        %vm515 = vweird.f32 %v498
        %vm516 = vweird.f32 %v509
        %vm517 = vmor %vm515, %vm516
        %v518 = vsel %vm517, %v509, %v514
        %v519 = vmul.f32 %v487, %v508
        %v520 = vmul.f32 %v488, %v518
        %v522 = vperm.slane %v472, 0
        %v524 = vmul.f32 %v519, %v522
        %v525 = vmul.f32 %v520, %v522
        %v527 = vperm.slane %v473, 0
        %v529 = vadd.f32 %v524, %v527
        %v530 = vadd.f32 %v525, %v527
        %v531 = vpack.c.bf16 %v530, %v529
        %v532 = vld [vmem:[%s3] sm:$0xff]
        %v533 = vld [vmem:[%s3 + $0x8] sm:$0xf]
        %v534 = vld [vmem:[%s3 + $0xc] sm:$0xff]
        %v535 = vld [vmem:[%s3 + $0x14] sm:$0xf]
        %v536 = vld [vmem:[%s3 + $0x18] sm:$0xff]
        %v537 = vld [vmem:[%s3 + $0x20] sm:$0xf]
        %v538 = vld [vmem:[%s3 + $0x24] sm:$0xff]
        %v539 = vld [vmem:[%s3 + $0x2c] sm:$0xf]
        %v540 = vld [vmem:[%s3 + $0x30] sm:$0xff]
        %v541 = vld [vmem:[%s3 + $0x38] sm:$0xf]
        %v542 = vld [vmem:[%s3 + $0x3c] sm:$0xff]
        %v543 = vld [vmem:[%s3 + $0x44] sm:$0xf]
        %v544 = vld [vmem:[%s3 + $0x48] sm:$0xff]
        %v545 = vld [vmem:[%s3 + $0x50] sm:$0xf]
        %v546 = vld [vmem:[%s3 + $0x54] sm:$0xff]
        %v547 = vld [vmem:[%s3 + $0x5c] sm:$0xf]
        %v548 = vld [vmem:[%s3 + $0x60] sm:$0xff]
        %v549 = vld [vmem:[%s3 + $0x68] sm:$0xf]
        %v550 = vld [vmem:[%s3 + $0x6c] sm:$0xff]
        %v551 = vld [vmem:[%s3 + $0x74] sm:$0xf]
        %v552 = vld [vmem:[%s3 + $0x78] sm:$0xff]
        %v553 = vld [vmem:[%s3 + $0x80] sm:$0xf]
        %v554 = vld [vmem:[%s3 + $0x84] sm:$0xff]
        %v555 = vld [vmem:[%s3 + $0x8c] sm:$0xf]
        %v556 = vld [vmem:[%s3 + $0x90] sm:$0xff]
        %v557 = vld [vmem:[%s3 + $0x98] sm:$0xf]
        %v558 = vld [vmem:[%s3 + $0x9c] sm:$0xff]
        %v559 = vld [vmem:[%s3 + $0xa4] sm:$0xf]
        %v560 = vld [vmem:[%s3 + $0xa8] sm:$0xff]
        %v561 = vld [vmem:[%s3 + $0xb0] sm:$0xf]
        %v562 = vld [vmem:[%s3 + $0xb4] sm:$0xff]
        %v563 = vld [vmem:[%s3 + $0xbc] sm:$0xf]
        %v596 = vunpack.c.l.b16 %v532
        %v597 = vunpack.c.h.b16 %v532
        %v598 = vunpack.c.l.b16 %v533
        %v599 = vunpack.c.l.b16 %v534
        %v600 = vunpack.c.h.b16 %v534
        %v601 = vunpack.c.l.b16 %v535
        %v602 = vunpack.c.l.b16 %v536
        %v603 = vunpack.c.h.b16 %v536
        %v604 = vunpack.c.l.b16 %v537
        %v605 = vunpack.c.l.b16 %v538
        %v606 = vunpack.c.h.b16 %v538
        %v607 = vunpack.c.l.b16 %v539
        %v608 = vunpack.c.l.b16 %v540
        %v609 = vunpack.c.h.b16 %v540
        %v610 = vunpack.c.l.b16 %v541
        %v611 = vunpack.c.l.b16 %v542
        %v612 = vunpack.c.h.b16 %v542
        %v613 = vunpack.c.l.b16 %v543
        %v614 = vunpack.c.l.b16 %v544
        %v615 = vunpack.c.h.b16 %v544
        %v616 = vunpack.c.l.b16 %v545
        %v617 = vunpack.c.l.b16 %v546
        %v618 = vunpack.c.h.b16 %v546
        %v619 = vunpack.c.l.b16 %v547
        %v620 = vunpack.c.l.b16 %v548
        %v621 = vunpack.c.h.b16 %v548
        %v622 = vunpack.c.l.b16 %v549
        %v623 = vunpack.c.l.b16 %v550
        %v624 = vunpack.c.h.b16 %v550
        %v625 = vunpack.c.l.b16 %v551
        %v626 = vunpack.c.l.b16 %v552
        %v627 = vunpack.c.h.b16 %v552
        %v628 = vunpack.c.l.b16 %v553
        %v629 = vunpack.c.l.b16 %v554
        %v630 = vunpack.c.h.b16 %v554
        %v631 = vunpack.c.l.b16 %v555
        %v632 = vunpack.c.l.b16 %v556
        %v633 = vunpack.c.h.b16 %v556
        %v634 = vunpack.c.l.b16 %v557
        %v635 = vunpack.c.l.b16 %v558
        %v636 = vunpack.c.h.b16 %v558
        %v637 = vunpack.c.l.b16 %v559
        %v638 = vunpack.c.l.b16 %v560
        %v639 = vunpack.c.h.b16 %v560
        %v640 = vunpack.c.l.b16 %v561
        %v641 = vunpack.c.l.b16 %v562
        %v642 = vunpack.c.h.b16 %v562
        %v643 = vunpack.c.l.b16 %v563
        %v644 = vpack.c.b16 %v599, %v596
        %v645 = vpack.c.b16 %v600, %v597
        %v646 = vpack.c.b16 %v601, %v598
        %v647 = vpack.c.b16 %v605, %v602
        %v648 = vpack.c.b16 %v606, %v603
        %v649 = vpack.c.b16 %v607, %v604
        %v650 = vpack.c.b16 %v611, %v608
        %v651 = vpack.c.b16 %v612, %v609
        %v652 = vpack.c.b16 %v613, %v610
        %v653 = vpack.c.b16 %v617, %v614
        %v654 = vpack.c.b16 %v618, %v615
        %v655 = vpack.c.b16 %v619, %v616
        %v656 = vpack.c.b16 %v623, %v620
        %v657 = vpack.c.b16 %v624, %v621
        %v658 = vpack.c.b16 %v625, %v622
        %v659 = vpack.c.b16 %v629, %v626
        %v660 = vpack.c.b16 %v630, %v627
        %v661 = vpack.c.b16 %v631, %v628
        %v662 = vpack.c.b16 %v635, %v632
        %v663 = vpack.c.b16 %v636, %v633
        %v664 = vpack.c.b16 %v637, %v634
        %v665 = vpack.c.b16 %v641, %v638
        %v666 = vpack.c.b16 %v642, %v639
        %v667 = vpack.c.b16 %v643, %v640
        %692 = vmatpush.bf16.msra.mxu0 %v665
        %693 = vmatpush.bf16.msra.mxu0 %v662
        %694 = vmatpush.bf16.msra.mxu0 %v659
        %695 = vmatpush.bf16.msra.mxu0 %v656
        %696 = vmatpush.bf16.msra.mxu0 %v653
        %697 = vmatpush.bf16.msra.mxu0 %v650
        %698 = vmatpush.bf16.msra.mxu0 %v647
        %699 = vmatpush.bf16.msra.mxu0 %v644
        %700 = vmatmul.bf16.gmra.mxu0 %v531
        %v701 = vpop.f32.mrf.mxu0
        %v702 = vadd.f32 0.0, %v701
        %v703 = vpop.f32.mrf.mxu0
        %v704 = vadd.f32 0.0, %v703
        %705 = vdwg.mxu0
        %706 = vmatpush.bf16.msra.mxu0 %v666
        %707 = vmatpush.bf16.msra.mxu0 %v663
        %708 = vmatpush.bf16.msra.mxu0 %v660
        %709 = vmatpush.bf16.msra.mxu0 %v657
        %710 = vmatpush.bf16.msra.mxu0 %v654
        %711 = vmatpush.bf16.msra.mxu0 %v651
        %712 = vmatpush.bf16.msra.mxu0 %v648
        %713 = vmatpush.bf16.msra.mxu0 %v645
        %714 = vmatmul.bf16.gmra.mxu0 %v531
        %v715 = vpop.f32.mrf.mxu0
        %v716 = vadd.f32 0.0, %v715
        %v717 = vpop.f32.mrf.mxu0
        %v718 = vadd.f32 0.0, %v717
        %719 = vdwg.mxu0
        %720 = vmatpush.bf16.msra.mxu0 %v667
        %721 = vmatpush.bf16.msra.mxu0 %v664
        %722 = vmatpush.bf16.msra.mxu0 %v661
        %723 = vmatpush.bf16.msra.mxu0 %v658
        %724 = vmatpush.bf16.msra.mxu0 %v655
        %725 = vmatpush.bf16.msra.mxu0 %v652
        %726 = vmatpush.bf16.msra.mxu0 %v649
        %727 = vmatpush.bf16.msra.mxu0 %v646
        %728 = vmatmul.bf16.gmra.mxu0 %v531
        %v729 = vpop.f32.mrf.mxu0
        %v730 = vadd.f32 0.0, %v729
        %v731 = vpop.f32.mrf.mxu0
        %v732 = vadd.f32 0.0, %v731
        %733 = vdwg.mxu0
        %v734 = vpack.c.bf16 %v716, %v702
        %v735 = vpack.c.bf16 %v730, %v730
        %v736 = vpack.c.bf16 %v718, %v704
        %v737 = vpack.c.bf16 %v732, %v732
        %738 = vst [vmem:[#allocation2] sm:$0xff] %v734
        %739 = vst [vmem:[#allocation2 + $0x8] sm:$0xf] %v735
        %740 = vst [vmem:[#allocation2 + $0xc] sm:$0xff] %v736
        %741 = vst [vmem:[#allocation2 + $0x14] sm:$0xf] %v737
      $region76: #{trans_unet_forward.4} parent=71 // pred_fallthru
        _
      %s742 = smul.u32 %s30, 16
      %s743 = scalar_lea.vmem %s454, %s742
      %v744 = vld [vmem:[%s743] sm:$0xff]
      %v745 = vld [vmem:[%s743 + $0x8] sm:$0xff]
      %s746 = sshra.s32 %s742, 3
      %s747 = sand.u32 %s742, 7
      %s748 = smul.u32 %s746, 3
      %s749 = smul.addr %s748, 4
      %s750 = scalar_lea.vmem [#allocation2], %s749
      %v751 = vld [vmem:[%s750] sm:$0xf]
      %v752 = vld [vmem:[%s750 + $0xc] sm:$0xf]
      %v753 = vld [vmem:[#allocation2 + $0x4] sm:$0xf]
      %v754 = vld [vmem:[#allocation2 + $0x10] sm:$0xf]
      %v755 = vld [vmem:[#allocation2 + $0x8] sm:$0xf]
      %v756 = vld [vmem:[#allocation2 + $0x14] sm:$0xf]
      %v759 = vunpack.c.l.b16 %v751
      %v760 = vunpack.c.l.b16 %v752
      %v761 = vpack.c.b16 %v760, %v759
      %v765 = vunpack.c.l.b16 %v753
      %v766 = vunpack.c.l.b16 %v754
      %v767 = vpack.c.b16 %v766, %v765
      %769 = vmatpush.bf16.xpose.msra.mxu0 0
      %770 = vmatpush.bf16.xpose.msra.mxu0 0
      %771 = vmatpush.bf16.xpose.msra.mxu0 0
      %772 = vmatpush.bf16.xpose.msra.mxu0 0
      %773 = vmatpush.bf16.xpose.msra.mxu0 0
      %774 = vmatpush.bf16.xpose.msra.mxu0 0
      %775 = vmatpush.bf16.xpose.msra.mxu0 0
      %776 = vmatpush.bf16.xpose.msra.mxu0 %v767
      %777 = vmatmul.bf16.gmra.mxu0 %v761
      %v778 = vpop.f32.mrf.mxu0
      %v779 = vadd.f32 0.0, %v778
      %v780 = vpop.f32.mrf.mxu0
      %v781 = vadd.f32 0.0, %v780
      %782 = vdwg.mxu0
      %v783 = vmul.f32 %v779, 0.088388346
      %v784 = vmul.f32 %v781, 0.088388346
      %vm785 = vcmask 130048
      %v786 = vsel %vm785, %v783, -inf
      %787 = vmax.xlane.f32.xlu0 %v786
      %v788 = vpop.xlane.xlu0 %787
      %v789 = vsel %vm785, %v784, -inf
      %790 = vmax.xlane.f32.xlu0 %v789
      %v791 = vpop.xlane.xlu0 %790
      %v792 = vsub.f32 %v783, %v788
      %v793 = vsub.f32 %v784, %v791
      %v794 = vmul.f32 %v792, 1.442695
      %v795 = vpow.pop %v794
      %v796 = vmul.f32 %v793, 1.442695
      %v797 = vpow.pop %v796
      %v798 = vsel %vm785, %v795, 0.0
      %799 = vadd.xlane.f32.xlu0 %v798
      %v800 = vpop.xlane.xlu0 %799
      %v801 = vsel %vm785, %v797, 0.0
      %802 = vadd.xlane.f32.xlu0 %v801
      %v803 = vpop.xlane.xlu0 %802
      %v804 = vrcp.pop %v800
      %v805 = vrcp.pop %v803
      %v806 = vmul.f32 %v795, %v804
      %v807 = vmul.f32 %v797, %v805
      %v808 = vpack.c.bf16 %v807, %v806
      %v811 = vunpack.c.l.b16 %v755
      %v812 = vunpack.c.l.b16 %v756
      %v813 = vpack.c.b16 %v812, %v811
      %v816 = vsel %vm785, %v808, 0
      %818 = vmatpush.bf16.msra.mxu0 0
      %819 = vmatpush.bf16.msra.mxu0 0
      %820 = vmatpush.bf16.msra.mxu0 0
      %821 = vmatpush.bf16.msra.mxu0 0
      %822 = vmatpush.bf16.msra.mxu0 0
      %823 = vmatpush.bf16.msra.mxu0 0
      %824 = vmatpush.bf16.msra.mxu0 0
      %825 = vmatpush.bf16.msra.mxu0 %v813
      %826 = vmatmul.bf16.gmra.mxu0 %v816
      %v827 = vpop.f32.mrf.mxu0
      %v828 = vadd.f32 0.0, %v827
      %v829 = vpop.f32.mrf.mxu0
      %v830 = vadd.f32 0.0, %v829
      %831 = vdwg.mxu0
      %v832 = vpack.c.bf16 %v830, %v828
      %v833 = vld [vmem:[%s4] sm:$0xf]
      %v834 = vld [vmem:[%s4 + $0x4] sm:$0xf]
      %v835 = vld [vmem:[%s4 + $0x8] sm:$0xf]
      %v836 = vld [vmem:[%s4 + $0xc] sm:$0xf]
      %v837 = vld [vmem:[%s4 + $0x10] sm:$0xf]
      %v838 = vld [vmem:[%s4 + $0x14] sm:$0xf]
      %v839 = vld [vmem:[%s4 + $0x18] sm:$0xf]
      %v840 = vld [vmem:[%s4 + $0x1c] sm:$0xf]
      %v841 = vld [vmem:[%s4 + $0x20] sm:$0xf]
      %v842 = vld [vmem:[%s4 + $0x24] sm:$0xf]
      %v843 = vld [vmem:[%s4 + $0x28] sm:$0xf]
      %v844 = vld [vmem:[%s4 + $0x2c] sm:$0xf]
      %v845 = vld [vmem:[%s4 + $0x30] sm:$0xf]
      %v846 = vld [vmem:[%s4 + $0x34] sm:$0xf]
      %v847 = vld [vmem:[%s4 + $0x38] sm:$0xf]
      %v848 = vld [vmem:[%s4 + $0x3c] sm:$0xf]
      %v865 = vunpack.c.l.b16 %v833
      %v866 = vunpack.c.l.b16 %v834
      %v867 = vunpack.c.l.b16 %v835
      %v868 = vunpack.c.l.b16 %v836
      %v869 = vunpack.c.l.b16 %v837
      %v870 = vunpack.c.l.b16 %v838
      %v871 = vunpack.c.l.b16 %v839
      %v872 = vunpack.c.l.b16 %v840
      %v873 = vunpack.c.l.b16 %v841
      %v874 = vunpack.c.l.b16 %v842
      %v875 = vunpack.c.l.b16 %v843
      %v876 = vunpack.c.l.b16 %v844
      %v877 = vunpack.c.l.b16 %v845
      %v878 = vunpack.c.l.b16 %v846
      %v879 = vunpack.c.l.b16 %v847
      %v880 = vunpack.c.l.b16 %v848
      %v881 = vpack.c.b16 %v866, %v865
      %v882 = vpack.c.b16 %v868, %v867
      %v883 = vpack.c.b16 %v870, %v869
      %v884 = vpack.c.b16 %v872, %v871
      %v885 = vpack.c.b16 %v874, %v873
      %v886 = vpack.c.b16 %v876, %v875
      %v887 = vpack.c.b16 %v878, %v877
      %v888 = vpack.c.b16 %v880, %v879
      %897 = vmatpush.bf16.msra.mxu0 %v888
      %898 = vmatpush.bf16.msra.mxu0 %v887
      %899 = vmatpush.bf16.msra.mxu0 %v886
      %900 = vmatpush.bf16.msra.mxu0 %v885
      %901 = vmatpush.bf16.msra.mxu0 %v884
      %902 = vmatpush.bf16.msra.mxu0 %v883
      %903 = vmatpush.bf16.msra.mxu0 %v882
      %904 = vmatpush.bf16.msra.mxu0 %v881
      %905 = vmatmul.bf16.gmra.mxu0 %v832
      %v906 = vpop.f32.mrf.mxu0
      %v907 = vadd.f32 0.0, %v906
      %v908 = vpop.f32.mrf.mxu0
      %v909 = vadd.f32 0.0, %v908
      %910 = vdwg.mxu0
      %v911 = vadd.f32 %v744, %v907
      %v912 = vadd.f32 %v745, %v909
      %v913 = vld [vmem:[%s5] sm:$0x1]
      %v914 = vld [vmem:[%s6] sm:$0x1]
      %915 = vadd.xlane.f32.xlu0 %v911
      %v916 = vpop.xlane.xlu0 %915
      %917 = vadd.xlane.f32.xlu0 %v912
      %v918 = vpop.xlane.xlu0 %917
      %v919 = vrcp.pop 128.0
      %v920 = vmul.f32 128.0, %v919
      %v921 = vsub.f32 1.0, %v920
      %v922 = vmul.f32 %v919, %v921
      %v923 = vadd.f32 %v919, %v922
      %vm924 = vweird.f32 %v919
      %v925 = vsel %vm924, %v919, %v923
      %v926 = vmul.f32 %v916, %v925
      %v927 = vmul.f32 %v918, %v925
      %v928 = vsub.f32 %v911, %v926
      %v929 = vsub.f32 %v912, %v927
      %v930 = vmul.f32 %v928, %v928
      %v931 = vmul.f32 %v929, %v929
      %932 = vadd.xlane.f32.xlu0 %v930
      %v933 = vpop.xlane.xlu0 %932
      %934 = vadd.xlane.f32.xlu0 %v931
      %v935 = vpop.xlane.xlu0 %934
      %v936 = vmul.f32 %v933, %v925
      %v937 = vmul.f32 %v935, %v925
      %v938 = vadd.f32 %v936, 1e-05
      %v939 = vadd.f32 %v937, 1e-05
      %v940 = vrsqrt.pop %v938
      %v941 = vmul.f32 %v940, %v938
      %v942 = vmul.f32 %v941, %v940
      %v943 = vmul.f32 0.5, %v942
      %v944 = vsub.f32 1.5, %v943
      %v945 = vmul.f32 %v940, %v944
      %vm946 = vweird.f32 %v938
      %vm947 = vweird.f32 %v940
      %vm948 = vmor %vm946, %vm947
      %v949 = vsel %vm948, %v940, %v945
      %v950 = vrsqrt.pop %v939
      %v951 = vmul.f32 %v950, %v939
      %v952 = vmul.f32 %v951, %v950
      %v953 = vmul.f32 0.5, %v952
      %v954 = vsub.f32 1.5, %v953
      %v955 = vmul.f32 %v950, %v954
      %vm956 = vweird.f32 %v939
      %vm957 = vweird.f32 %v950
      %vm958 = vmor %vm956, %vm957
      %v959 = vsel %vm958, %v950, %v955
      %v960 = vmul.f32 %v928, %v949
      %v961 = vmul.f32 %v929, %v959
      %v963 = vperm.slane %v913, 0
      %v965 = vmul.f32 %v960, %v963
      %v966 = vmul.f32 %v961, %v963
      %v968 = vperm.slane %v914, 0
      %v970 = vadd.f32 %v965, %v968
      %v971 = vadd.f32 %v966, %v968
      %v972 = vpack.c.bf16 %v971, %v970
      %v973 = vld [vmem:[%s7] sm:$0xff]
      %v974 = vld [vmem:[%s7 + $0x8] sm:$0xff]
      %v975 = vld [vmem:[%s7 + $0x10] sm:$0xff]
      %v976 = vld [vmem:[%s7 + $0x18] sm:$0xff]
      %v977 = vld [vmem:[%s7 + $0x20] sm:$0xff]
      %v978 = vld [vmem:[%s7 + $0x28] sm:$0xff]
      %v979 = vld [vmem:[%s7 + $0x30] sm:$0xff]
      %v980 = vld [vmem:[%s7 + $0x38] sm:$0xff]
      %v981 = vld [vmem:[%s7 + $0x40] sm:$0xff]
      %v982 = vld [vmem:[%s7 + $0x48] sm:$0xff]
      %v983 = vld [vmem:[%s7 + $0x50] sm:$0xff]
      %v984 = vld [vmem:[%s7 + $0x58] sm:$0xff]
      %v985 = vld [vmem:[%s7 + $0x60] sm:$0xff]
      %v986 = vld [vmem:[%s7 + $0x68] sm:$0xff]
      %v987 = vld [vmem:[%s7 + $0x70] sm:$0xff]
      %v988 = vld [vmem:[%s7 + $0x78] sm:$0xff]
      %v989 = vld [vmem:[%s8] sm:$0x3]
      %v991 = vperm.slane %v989, 0
      %v992 = vperm.slane %v989, 1
      %v1011 = vunpack.c.l.b16 %v973
      %v1012 = vunpack.c.h.b16 %v973
      %v1013 = vunpack.c.l.b16 %v974
      %v1014 = vunpack.c.h.b16 %v974
      %v1015 = vunpack.c.l.b16 %v975
      %v1016 = vunpack.c.h.b16 %v975
      %v1017 = vunpack.c.l.b16 %v976
      %v1018 = vunpack.c.h.b16 %v976
      %v1019 = vunpack.c.l.b16 %v977
      %v1020 = vunpack.c.h.b16 %v977
      %v1021 = vunpack.c.l.b16 %v978
      %v1022 = vunpack.c.h.b16 %v978
      %v1023 = vunpack.c.l.b16 %v979
      %v1024 = vunpack.c.h.b16 %v979
      %v1025 = vunpack.c.l.b16 %v980
      %v1026 = vunpack.c.h.b16 %v980
      %v1027 = vunpack.c.l.b16 %v981
      %v1028 = vunpack.c.h.b16 %v981
      %v1029 = vunpack.c.l.b16 %v982
      %v1030 = vunpack.c.h.b16 %v982
      %v1031 = vunpack.c.l.b16 %v983
      %v1032 = vunpack.c.h.b16 %v983
      %v1033 = vunpack.c.l.b16 %v984
      %v1034 = vunpack.c.h.b16 %v984
      %v1035 = vunpack.c.l.b16 %v985
      %v1036 = vunpack.c.h.b16 %v985
      %v1037 = vunpack.c.l.b16 %v986
      %v1038 = vunpack.c.h.b16 %v986
      %v1039 = vunpack.c.l.b16 %v987
      %v1040 = vunpack.c.h.b16 %v987
      %v1041 = vunpack.c.l.b16 %v988
      %v1042 = vunpack.c.h.b16 %v988
      %v1043 = vpack.c.b16 %v1013, %v1011
      %v1044 = vpack.c.b16 %v1014, %v1012
      %v1045 = vpack.c.b16 %v1017, %v1015
      %v1046 = vpack.c.b16 %v1018, %v1016
      %v1047 = vpack.c.b16 %v1021, %v1019
      %v1048 = vpack.c.b16 %v1022, %v1020
      %v1049 = vpack.c.b16 %v1025, %v1023
      %v1050 = vpack.c.b16 %v1026, %v1024
      %v1051 = vpack.c.b16 %v1029, %v1027
      %v1052 = vpack.c.b16 %v1030, %v1028
      %v1053 = vpack.c.b16 %v1033, %v1031
      %v1054 = vpack.c.b16 %v1034, %v1032
      %v1055 = vpack.c.b16 %v1037, %v1035
      %v1056 = vpack.c.b16 %v1038, %v1036
      %v1057 = vpack.c.b16 %v1041, %v1039
      %v1058 = vpack.c.b16 %v1042, %v1040
      %1075 = vmatpush.bf16.msra.mxu0 %v1057
      %1076 = vmatpush.bf16.msra.mxu0 %v1055
      %1077 = vmatpush.bf16.msra.mxu0 %v1053
      %1078 = vmatpush.bf16.msra.mxu0 %v1051
      %1079 = vmatpush.bf16.msra.mxu0 %v1049
      %1080 = vmatpush.bf16.msra.mxu0 %v1047
      %1081 = vmatpush.bf16.msra.mxu0 %v1045
      %1082 = vmatpush.bf16.msra.mxu0 %v1043
      %1083 = vmatmul.bf16.gmra.mxu0 %v972
      %v1084 = vpop.f32.mrf.mxu0
      %v1085 = vadd.f32 %v991, %v1084
      %v1086 = vpop.f32.mrf.mxu0
      %v1087 = vadd.f32 %v991, %v1086
      %1088 = vdwg.mxu0
      %1089 = vmatpush.bf16.msra.mxu0 %v1058
      %1090 = vmatpush.bf16.msra.mxu0 %v1056
      %1091 = vmatpush.bf16.msra.mxu0 %v1054
      %1092 = vmatpush.bf16.msra.mxu0 %v1052
      %1093 = vmatpush.bf16.msra.mxu0 %v1050
      %1094 = vmatpush.bf16.msra.mxu0 %v1048
      %1095 = vmatpush.bf16.msra.mxu0 %v1046
      %1096 = vmatpush.bf16.msra.mxu0 %v1044
      %1097 = vmatmul.bf16.gmra.mxu0 %v972
      %v1098 = vpop.f32.mrf.mxu0
      %v1099 = vadd.f32 %v992, %v1098
      %v1100 = vpop.f32.mrf.mxu0
      %v1101 = vadd.f32 %v992, %v1100
      %1102 = vdwg.mxu0
      %v1103 = vmul.f32 %v1085, %v1085
      %v1104 = vmul.f32 %v1099, %v1099
      %v1105 = vmul.f32 %v1087, %v1087
      %v1106 = vmul.f32 %v1101, %v1101
      %v1107 = vmul.f32 %v1085, %v1103
      %v1108 = vmul.f32 %v1099, %v1104
      %v1109 = vmul.f32 %v1087, %v1105
      %v1110 = vmul.f32 %v1101, %v1106
      %v1111 = vmul.f32 %v1107, 0.044715
      %v1112 = vmul.f32 %v1108, 0.044715
      %v1113 = vmul.f32 %v1109, 0.044715
      %v1114 = vmul.f32 %v1110, 0.044715
      %v1115 = vadd.f32 %v1085, %v1111
      %v1116 = vadd.f32 %v1099, %v1112
      %v1117 = vadd.f32 %v1087, %v1113
      %v1118 = vadd.f32 %v1101, %v1114
      %v1119 = vmul.f32 %v1115, 0.7978846
      %v1120 = vmul.f32 %v1116, 0.7978846
      %v1121 = vmul.f32 %v1117, 0.7978846
      %v1122 = vmul.f32 %v1118, 0.7978846
      %v1123 = vtanh.pop %v1119
      %v1124 = vtanh.pop %v1120
      %v1125 = vtanh.pop %v1121
      %v1126 = vtanh.pop %v1122
      %v1127 = vadd.f32 %v1123, 1.0
      %v1128 = vadd.f32 %v1124, 1.0
      %v1129 = vadd.f32 %v1125, 1.0
      %v1130 = vadd.f32 %v1126, 1.0
      %v1131 = vmul.f32 %v1127, 0.5
      %v1132 = vmul.f32 %v1128, 0.5
      %v1133 = vmul.f32 %v1129, 0.5
      %v1134 = vmul.f32 %v1130, 0.5
      %v1135 = vmul.f32 %v1085, %v1131
      %v1136 = vmul.f32 %v1099, %v1132
      %v1137 = vmul.f32 %v1087, %v1133
      %v1138 = vmul.f32 %v1101, %v1134
      %v1139 = vpack.c.bf16 %v1137, %v1135
      %v1140 = vpack.c.bf16 %v1138, %v1136
      %v1141 = vld [vmem:[%s9] sm:$0xf]
      %v1142 = vld [vmem:[%s9 + $0x4] sm:$0xf]
      %v1143 = vld [vmem:[%s9 + $0x8] sm:$0xf]
      %v1144 = vld [vmem:[%s9 + $0xc] sm:$0xf]
      %v1145 = vld [vmem:[%s9 + $0x10] sm:$0xf]
      %v1146 = vld [vmem:[%s9 + $0x14] sm:$0xf]
      %v1147 = vld [vmem:[%s9 + $0x18] sm:$0xf]
      %v1148 = vld [vmem:[%s9 + $0x1c] sm:$0xf]
      %v1149 = vld [vmem:[%s9 + $0x20] sm:$0xf]
      %v1150 = vld [vmem:[%s9 + $0x24] sm:$0xf]
      %v1151 = vld [vmem:[%s9 + $0x28] sm:$0xf]
      %v1152 = vld [vmem:[%s9 + $0x2c] sm:$0xf]
      %v1153 = vld [vmem:[%s9 + $0x30] sm:$0xf]
      %v1154 = vld [vmem:[%s9 + $0x34] sm:$0xf]
      %v1155 = vld [vmem:[%s9 + $0x38] sm:$0xf]
      %v1156 = vld [vmem:[%s9 + $0x3c] sm:$0xf]
      %v1157 = vld [vmem:[%s9 + $0x40] sm:$0xf]
      %v1158 = vld [vmem:[%s9 + $0x44] sm:$0xf]
      %v1159 = vld [vmem:[%s9 + $0x48] sm:$0xf]
      %v1160 = vld [vmem:[%s9 + $0x4c] sm:$0xf]
      %v1161 = vld [vmem:[%s9 + $0x50] sm:$0xf]
      %v1162 = vld [vmem:[%s9 + $0x54] sm:$0xf]
      %v1163 = vld [vmem:[%s9 + $0x58] sm:$0xf]
      %v1164 = vld [vmem:[%s9 + $0x5c] sm:$0xf]
      %v1165 = vld [vmem:[%s9 + $0x60] sm:$0xf]
      %v1166 = vld [vmem:[%s9 + $0x64] sm:$0xf]
      %v1167 = vld [vmem:[%s9 + $0x68] sm:$0xf]
      %v1168 = vld [vmem:[%s9 + $0x6c] sm:$0xf]
      %v1169 = vld [vmem:[%s9 + $0x70] sm:$0xf]
      %v1170 = vld [vmem:[%s9 + $0x74] sm:$0xf]
      %v1171 = vld [vmem:[%s9 + $0x78] sm:$0xf]
      %v1172 = vld [vmem:[%s9 + $0x7c] sm:$0xf]
      %v1173 = vld [vmem:[%s10] sm:$0x1]
      %v1175 = vperm.slane %v1173, 0
      %v1209 = vunpack.c.l.b16 %v1141
      %v1210 = vunpack.c.l.b16 %v1142
      %v1211 = vunpack.c.l.b16 %v1143
      %v1212 = vunpack.c.l.b16 %v1144
      %v1213 = vunpack.c.l.b16 %v1145
      %v1214 = vunpack.c.l.b16 %v1146
      %v1215 = vunpack.c.l.b16 %v1147
      %v1216 = vunpack.c.l.b16 %v1148
      %v1217 = vunpack.c.l.b16 %v1149
      %v1218 = vunpack.c.l.b16 %v1150
      %v1219 = vunpack.c.l.b16 %v1151
      %v1220 = vunpack.c.l.b16 %v1152
      %v1221 = vunpack.c.l.b16 %v1153
      %v1222 = vunpack.c.l.b16 %v1154
      %v1223 = vunpack.c.l.b16 %v1155
      %v1224 = vunpack.c.l.b16 %v1156
      %v1225 = vunpack.c.l.b16 %v1157
      %v1226 = vunpack.c.l.b16 %v1158
      %v1227 = vunpack.c.l.b16 %v1159
      %v1228 = vunpack.c.l.b16 %v1160
      %v1229 = vunpack.c.l.b16 %v1161
      %v1230 = vunpack.c.l.b16 %v1162
      %v1231 = vunpack.c.l.b16 %v1163
      %v1232 = vunpack.c.l.b16 %v1164
      %v1233 = vunpack.c.l.b16 %v1165
      %v1234 = vunpack.c.l.b16 %v1166
      %v1235 = vunpack.c.l.b16 %v1167
      %v1236 = vunpack.c.l.b16 %v1168
      %v1237 = vunpack.c.l.b16 %v1169
      %v1238 = vunpack.c.l.b16 %v1170
      %v1239 = vunpack.c.l.b16 %v1171
      %v1240 = vunpack.c.l.b16 %v1172
      %v1241 = vpack.c.b16 %v1210, %v1209
      %v1242 = vpack.c.b16 %v1212, %v1211
      %v1243 = vpack.c.b16 %v1214, %v1213
      %v1244 = vpack.c.b16 %v1216, %v1215
      %v1245 = vpack.c.b16 %v1218, %v1217
      %v1246 = vpack.c.b16 %v1220, %v1219
      %v1247 = vpack.c.b16 %v1222, %v1221
      %v1248 = vpack.c.b16 %v1224, %v1223
      %v1249 = vpack.c.b16 %v1226, %v1225
      %v1250 = vpack.c.b16 %v1228, %v1227
      %v1251 = vpack.c.b16 %v1230, %v1229
      %v1252 = vpack.c.b16 %v1232, %v1231
      %v1253 = vpack.c.b16 %v1234, %v1233
      %v1254 = vpack.c.b16 %v1236, %v1235
      %v1255 = vpack.c.b16 %v1238, %v1237
      %v1256 = vpack.c.b16 %v1240, %v1239
      %1273 = vmatpush.bf16.msra.mxu0 %v1248
      %1274 = vmatpush.bf16.msra.mxu0 %v1247
      %1275 = vmatpush.bf16.msra.mxu0 %v1246
      %1276 = vmatpush.bf16.msra.mxu0 %v1245
      %1277 = vmatpush.bf16.msra.mxu0 %v1244
      %1278 = vmatpush.bf16.msra.mxu0 %v1243
      %1279 = vmatpush.bf16.msra.mxu0 %v1242
      %1280 = vmatpush.bf16.msra.mxu0 %v1241
      %1281 = vmatmul.bf16.gmra.mxu0 %v1139
      %v1282 = vpop.f32.mrf.mxu0
      %v1283 = vadd.f32 %v1175, %v1282
      %v1284 = vpop.f32.mrf.mxu0
      %v1285 = vadd.f32 %v1175, %v1284
      %1286 = vdwg.mxu0
      %1287 = vmatpush.bf16.msra.mxu0 %v1256
      %1288 = vmatpush.bf16.msra.mxu0 %v1255
      %1289 = vmatpush.bf16.msra.mxu0 %v1254
      %1290 = vmatpush.bf16.msra.mxu0 %v1253
      %1291 = vmatpush.bf16.msra.mxu0 %v1252
      %1292 = vmatpush.bf16.msra.mxu0 %v1251
      %1293 = vmatpush.bf16.msra.mxu0 %v1250
      %1294 = vmatpush.bf16.msra.mxu0 %v1249
      %1295 = vmatmul.bf16.gmra.mxu0 %v1140
      %v1296 = vpop.f32.mrf.mxu0
      %v1297 = vadd.f32 %v1283, %v1296
      %v1298 = vpop.f32.mrf.mxu0
      %v1299 = vadd.f32 %v1285, %v1298
      %1300 = vdwg.mxu0
      %v1301 = vadd.f32 %v911, %v1297
      %v1302 = vadd.f32 %v912, %v1299
      %v1303 = vld [vmem:[%s11] sm:$0x1]
      %v1305 = vperm.slane %v1303, 0
      %v1307 = vmul.f32 %v1301, %v1305
      %v1308 = vmul.f32 %v1302, %v1305
      %1309 = vadd.xlane.f32.xlu0 %v1307
      %v1310 = vpop.xlane.xlu0 %1309
      %1311 = vadd.xlane.f32.xlu0 %v1308
      %v1312 = vpop.xlane.xlu0 %1311
      %s1313 = sld [smem:[#allocation3]]
      %v1314 = vstv %s1313
      %v1315 = vadd.f32 %v1310, %v1314
      %v1316 = vadd.f32 %v1312, %v1314
      %vm1317 = vcmask 7168
      %1318 = vst.msk [vmem:[%s463] sm:$0xff] %vm1317, %v1315
      %1319 = vst.msk [vmem:[%s463 + $0x8] sm:$0xff] %vm1317, %v1316
      %s1320 = smul.u32 2, %s30
      %p1321 = scmp.lt.s32.totalorder %s29, 1
      %s1322 = scalar_select %p1321, %s29, 1
      %p1323 = scmp.lt.s32.totalorder %s1320, 1
      %s1324 = scalar_select %p1323, %s1320, 1
      %s1325 = smul.addr %s1322, 2
      %s1326 = sadd.s32 %s1324, %s1325
      %s1327 = smul.addr %s1326, 8
      %s1328 = scalar_lea.vmem %s13, %s1327
      // Predicated region
      $region77: #{trans_unet_forward.4} parent=71 // pred_check
        %p1329 = pneg %p335
      $region78: #{trans_unet_forward.4} parent=71 // pred_check_branch
        %1331 = sbr.rel (%p1329) target = $region80
      $region79: #{trans_unet_forward.4} parent=71 // pred_region
        %s1332 = smul.u32 2, %s30
      $region80: #{trans_unet_forward.4} parent=71 // pred_fallthru
        _
    $region72: #{trans_unet_forward.4} parent=5 // pred_fallthru
      _
    %p1333 = scmp.le.s32.totalorder 2, %s20
    // Predicated region
    $region81: #{trans_unet_forward.4} parent=5 // pred_check
      %p1334 = pneg %p1333
    $region82: #{trans_unet_forward.4} parent=5 // pred_check_branch
      %1336 = sbr.rel (%p1334) target = $region84
    $region83: #{trans_unet_forward.4} parent=5 // pred_region
      %s1337 = ssub.s32 %s20, 2
      // Predicated region
      $region85: #{trans_unet_forward.4} parent=83 // pred_check
        %p1338 = pneg %p341
      $region86: #{trans_unet_forward.4} parent=83 // pred_check_branch
        %1340 = sbr.rel (%p1338) target = $region88
      $region87: #{trans_unet_forward.4} parent=83 // pred_region
        %s1341 = smul.u32 2, %s32
        %p1342 = scmp.lt.s32.totalorder %s31, 1
        %s1343 = scalar_select %p1342, %s31, 1
        %p1344 = scmp.lt.s32.totalorder %s1341, 1
        %s1345 = scalar_select %p1344, %s1341, 1
        %s1346 = smul.addr %s1343, 2
        %s1347 = sadd.s32 %s1345, %s1346
        %s1348 = smul.addr %s1347, 8
        %s1349 = scalar_lea.vmem %s13, %s1348
      $region88: #{trans_unet_forward.4} parent=83 // pred_fallthru
        _
    $region84: #{trans_unet_forward.4} parent=5 // pred_fallthru
      _
  $region6: #{trans_unet_forward.4} parent=0 // loop_footer
    %s24 = sadd.s32 1, %s20
  $region7: #{trans_unet_forward.4} parent=0 // loop_footer_branch
    %19 = sbr.rel target = $region3
  $region8: #{trans_unet_forward.4} parent=0 // loop_exit
    _

</llo_original>
